<compile_context>
chip_gen: v6e
topology: v6e:2x2x1
jax: 0.10.0
libtpu: 0.0.40
codegen_flags: <defaults>
</compile_context>

<pallas_src>
import numpy as np
import jax
import jax.numpy as jnp
from jax.experimental import pallas as pl
from jax.experimental.pallas import tpu as pltpu


def _rup(v, m):
    return -(-int(v) // m) * m


def _sublane(itemsize):
    return {4: 8, 2: 16, 1: 32}.get(int(itemsize), 8)


# --------------------------- kernel bodies ----------------------------------


def _kernel_folded(x_ref, w_ref, bias_ref, b_ref, out_ref):
    """x_ref: (nb, C, TSc) batch group / T-chunk; w_ref: (3, C) conv taps;
    bias_ref: (1,) SMEM scalar; b_ref: (3, TSc, L) pool+shift+upsample folded
    per-tap matrices for this T-chunk; out_ref: (nb, L) resident accumulator."""
    tc = pl.program_id(1)
    nb = x_ref.shape[0]

    @pl.when(tc == 0)
    def _():
        out_ref[...] = jnp.zeros_like(out_ref)

    w = w_ref[...]
    for b in range(nb):                               # nb is small; static unroll
        # Channel contraction on the MXU: (3, C) @ (C, TSc) -> (3, TSc)
        y = jnp.dot(w, x_ref[b], preferred_element_type=jnp.float32)
        # Spatial mean + conv shift + linear upsample folded into (TSc, L) mats.
        z = (jnp.dot(y[0:1, :], b_ref[0], preferred_element_type=jnp.float32)
             + jnp.dot(y[1:2, :], b_ref[1], preferred_element_type=jnp.float32)
             + jnp.dot(y[2:3, :], b_ref[2], preferred_element_type=jnp.float32))
        out_ref[pl.ds(b, 1), :] = out_ref[pl.ds(b, 1), :] + z

    @pl.when(tc == pl.num_programs(1) - 1)
    def _():
        out_ref[...] = out_ref[...] + bias_ref[0]


def _kernel_unfolded(x_ref, w_ref, bias_ref, p_ref, a_ref, out_ref):
    """Large-T*L variant: p_ref (TSc, Tc) is the per-chunk spatial-mean matrix
    (identical for every chunk); a_ref (Tc, 3, L) holds this chunk's rows of
    the conv-shifted, boundary-masked upsample matrices."""
    tc = pl.program_id(1)
    nb = x_ref.shape[0]

    @pl.when(tc == 0)
    def _():
        out_ref[...] = jnp.zeros_like(out_ref)

    w = w_ref[...]
    p = p_ref[...]
    a = a_ref[...]                                    # (Tc, 3, L)
    for b in range(nb):
        y = jnp.dot(w, x_ref[b], preferred_element_type=jnp.float32)     # (3, TSc)
        pooled = jnp.dot(y, p, preferred_element_type=jnp.float32)       # (3, Tc)
        z = (jnp.dot(pooled[0:1, :], a[:, 0, :], preferred_element_type=jnp.float32)
             + jnp.dot(pooled[1:2, :], a[:, 1, :], preferred_element_type=jnp.float32)
             + jnp.dot(pooled[2:3, :], a[:, 2, :], preferred_element_type=jnp.float32))
        out_ref[pl.ds(b, 1), :] = out_ref[pl.ds(b, 1), :] + z

    @pl.when(tc == pl.num_programs(1) - 1)
    def _():
        out_ref[...] = out_ref[...] + bias_ref[0]


# --------------------------- host-side constants ----------------------------


def _build_linear_upsample_matrix(t_in, t_out):
    """PyTorch nn.Upsample(mode='linear', align_corners=False) as (t_out, t_in)."""
    A = np.zeros((t_out, t_in), dtype=np.float32)
    scale = t_in / t_out
    for l in range(t_out):
        s = max((l + 0.5) * scale - 0.5, 0.0)
        i0 = min(int(np.floor(s)), t_in - 1)
        i1 = min(i0 + 1, t_in - 1)
        lam = np.float32(s - i0)
        A[l, i0] += 1.0 - lam
        A[l, i1] += lam
    return A


def _build_tap_upsample(t_in, t_out):
    """(3, T, L): per-tap matrices folding the conv's +-1 temporal shift and the
    zero padding (exact zeros at the boundaries) into the upsample matrix."""
    A = _build_linear_upsample_matrix(t_in, t_out)      # (L, T)
    AT = np.ascontiguousarray(A.T)                      # (T, L)
    A0 = np.zeros_like(AT)
    A2 = np.zeros_like(AT)
    if t_in > 1:
        A0[: t_in - 1] = AT[1:]                         # Y[0,t'] -> z[t'+1]
        A2[1:] = AT[: t_in - 1]                         # Y[2,t'] -> z[t'-1]
    return np.stack([A0, AT, A2], axis=0)               # (3, T, L)


def _build_pool_matrix(t, s):
    """(t*s, t) block matrix with 1/s entries: matmul == per-frame spatial mean."""
    return np.kron(np.eye(t, dtype=np.float32),
                   np.full((s, 1), 1.0 / s, dtype=np.float32))


# --------------------------- wrapper -----------------------------------------


def video_segmentation_head(x, conv_w, conv_b, output_len, *,
                            block_target_bytes=2 << 20,
                            fold_threshold_bytes=2 << 20):
    """x: (N, C=2048, T, H, W) (NCDHW, as in PyTorch), f32 or bf16 (bf16 is
    consumed as-is -> half the HBM traffic).  conv_w: (3, C) with
    conv_w[k, c] == torch weight[0, c, k, 0, 0], or the raw PyTorch
    (1, C, 3, 1, 1) Conv3d weight.  conv_b: (1,).
    Returns (N, output_len) float32 (== module output .squeeze() for N>1)."""
    N, C, T, H, W = x.shape
    # The module asserts x.shape[-1]==1 after pooling -> W must be 8; we also
    # require H==8 (spatially-global pooling), the configuration the head targets.
    assert H == 8 and W == 8, "VideoSegmentationHead requires H == W == 8"
    S = H * W
    TS = T * S
    L = int(output_len)

    if conv_w.ndim == 5:                                 # raw torch (1, C, 3, 1, 1)
        conv_w = jnp.transpose(conv_w[0, :, :, 0, 0], (1, 0))
    w_t = conv_w.astype(x.dtype)                         # (3, C) lane-dense taps
    bias = jnp.asarray(conv_b, jnp.float32).reshape((1,))

    # Free, contiguous reshape (NO HBM transpose): (N,C,T,H,W) -> (N,C,T*S)
    x_r = x.reshape(N, C, TS)
    itemsize = int(np.dtype(x_r.dtype).itemsize)

    # ---- T-chunk size (second, "arbitrary", grid axis) ----------------------
    frame_bytes = C * S * itemsize
    tc_target = max(1, int(block_target_bytes) // frame_bytes)
    if tc_target >= T:
        Tc = T
    else:
        cap = max(2, tc_target - (tc_target % 2))
        Tc = T                                           # fallback: no chunking
        for d in range(cap, 1, -1):
            # x block's last dim is Tc*64; Tc even keeps it a multiple of 128 lanes.
            if d % 2 == 0 and T % d == 0:
                Tc = d
                break
        # TODO(synk): odd / prime T with huge per-frame blocks falls back to
        # Tc = T; a ragged last chunk (pl.BoundedSlice) would cover that case.
    n_tchunks = T // Tc
    TSc = Tc * S

    # ---- batch-group size (first, "parallel", grid axis) --------------------
    if Tc == T:
        per_batch = C * TS * itemsize
        nb_bytes = max(1, int(block_target_bytes) // per_batch)
        desired_groups = min(N, 8)          # keep >= ~8 grid steps for pipelining
        nb_max = int(max(1, min(nb_bytes, N // desired_groups, 8)))
        best, best_even = 1, None
        for d in range(1, nb_max + 1):
            if N % d == 0:
                best = d
                if (N // d) % 2 == 0:       # even step count -> v7x 2-TC sharding
                    best_even = d
        nb = best_even if best_even is not None else best
    else:
        nb = 1                              # T-chunking already gives many steps
    n_groups = N // nb
    grid = (n_groups, n_tchunks)

    # ---- constants (pool / conv-shift / upsample matrices) ------------------
    AUP = _build_tap_upsample(T, L)                       # (3, T, L) float32
    fold_bytes = 3 * TS * L * 4
    folded = fold_bytes <= int(fold_threshold_bytes)
    if folded:
        # B[k] = P @ A_k  (spatial mean folded into the per-tap matrices).
        B = np.repeat(AUP, S, axis=1) * np.float32(1.0 / S)   # (3, TS, L)
        consts = (jnp.asarray(B),)
    else:
        P_chunk = _build_pool_matrix(Tc, S)               # (TSc, Tc), same each chunk
        AUP_t = np.ascontiguousarray(np.transpose(AUP, (1, 0, 2)))  # (T, 3, L)
        consts = (jnp.asarray(P_chunk), jnp.asarray(AUP_t))

    # ---- VMEM budget (bf16-aware sublane rounding, v7x-safe clamp) ----------
    w_itemsize = int(np.dtype(w_t.dtype).itemsize)
    block_in = nb * _rup(C, _sublane(itemsize)) * _rup(TSc, 128) * itemsize
    const_bytes = _rup(3, _sublane(w_itemsize)) * _rup(C, 128) * w_itemsize
    if folded:
        const_bytes += 3 * _rup(TSc, 8) * _rup(L, 128) * 4
    else:
        const_bytes += (_rup(TSc, 8) * _rup(Tc, 128) * 4
                        + Tc * _rup(3, 8) * _rup(L, 128) * 4)
    out_block = _rup(nb, 8) * _rup(L, 128) * 4
    needed = 2 * block_in + 2 * const_bytes + 2 * out_block + (2 << 20)
    try:
        info = pltpu.get_tpu_info()
        vmem_cap = int(getattr(info, "vmem_capacity_bytes", 64 << 20))
    except Exception:
        vmem_cap = 64 << 20                               # v7x-safe default
    vmem_limit = int(min(max(needed, 32 << 20), max(32 << 20, (vmem_cap * 4) // 5)))

    # ---- advisory cost estimate (the kernel is HBM-bandwidth bound) ---------
    if folded:
        flops = 2 * N * 3 * (C * TS + TS * L)
        const_stream = n_groups * 3 * TS * L * 4
    else:
        flops = 2 * N * 3 * (C * TS + TS * Tc + T * L)
        const_stream = n_groups * 3 * T * L * 4 + TSc * Tc * 4
    bytes_accessed = (N * C * TS * itemsize + N * L * 4
                      + 3 * C * w_itemsize + const_stream + 4)
    cost = pl.CostEstimate(flops=int(flops), transcendentals=0,
                           bytes_accessed=int(bytes_accessed))

    # ---- specs ---------------------------------------------------------------
    # TODO(synk): sweep pipeline_mode=pl.Buffered(3) on in_specs[0] for v5e/v6e
    # once profiling shows exposed DMA between grid steps.
    in_specs = [
        pl.BlockSpec((nb, C, TSc), lambda g, t: (g, 0, t)),       # batch/T chunk
        pl.BlockSpec((3, C), lambda g, t: (0, 0)),                # conv taps
        pl.BlockSpec(memory_space=pltpu.MemorySpace.SMEM),        # bias scalar
    ]
    if folded:
        kernel = _kernel_folded
        in_specs.append(pl.BlockSpec((3, TSc, L), lambda g, t: (0, t, 0)))
    else:
        kernel = _kernel_unfolded
        in_specs.append(pl.BlockSpec((TSc, Tc), lambda g, t: (0, 0)))
        in_specs.append(pl.BlockSpec((Tc, 3, L), lambda g, t: (t, 0, 0)))

    out = pl.pallas_call(
        kernel,
        out_shape=jax.ShapeDtypeStruct((n_groups, nb, L), jnp.float32),
        grid=grid,
        in_specs=in_specs,
        out_specs=pl.BlockSpec((None, nb, L), lambda g, t: (g, 0, 0)),
        compiler_params=pltpu.CompilerParams(
            dimension_semantics=("parallel", "arbitrary"),
            vmem_limit_bytes=vmem_limit),
        cost_estimate=cost,
    )(x_r, w_t, bias, *consts)

    return out.reshape(N, L)                              # free contiguous reshape


# --------------------------- reference & self-test ---------------------------


def _reference(x, conv_w, conv_b, output_len):
    """Pure-JAX reference of the PyTorch forward (H = W = 8)."""
    N, C, T, H, W = x.shape
    pooled = jnp.mean(x.astype(jnp.float32), axis=(3, 4))        # (N, C, T)
    pad = jnp.pad(pooled, ((0, 0), (0, 0), (1, 1)))              # temporal zero pad
    z = conv_b[0] + sum(
        jnp.einsum('nct,c->nt', pad[:, :, k:k + T], conv_w[k]) for k in range(3))
    A = jnp.asarray(_build_linear_upsample_matrix(T, output_len))  # (L, T)
    return z @ A.T                                               # (N, L)


if __name__ == "__main__":
    key = jax.random.PRNGKey(0)
    N, C, H, W = 2, 2048, 8, 8            # C fixed at 2048 by the module

    k1, k2, k3 = jax.random.split(key, 3)
    fan_in = C * 3 * 1 * 1
    bound = 1.0 / float(np.sqrt(fan_in))
    conv_w = jax.random.uniform(k2, (3, C), jnp.float32, -bound, bound)  # [k, c]
    conv_b = jax.random.uniform(k3, (1,), jnp.float32, -bound, bound)

    # 1) default config: folded-matrix path, batch-grouped ("parallel") grid
    T, L = 4, 16
    x = jax.random.normal(k1, (N, C, T, H, W), jnp.float32)
    out = jax.block_until_ready(video_segmentation_head(x, conv_w, conv_b, L))
    ref = _reference(x, conv_w, conv_b, L)
    np.testing.assert_allclose(np.asarray(out), np.asarray(ref), rtol=5e-3, atol=5e-3)

    # 2) force the T-chunked, unfolded (pool-matrix) path
    T2, L2 = 8, 16
    x2 = jax.random.normal(jax.random.PRNGKey(1), (N, C, T2, H, W), jnp.float32)
    out2 = jax.block_until_ready(video_segmentation_head(
        x2, conv_w, conv_b, L2, block_target_bytes=1 << 20, fold_threshold_bytes=0))
    ref2 = _reference(x2, conv_w, conv_b, L2)
    np.testing.assert_allclose(np.asarray(out2), np.asarray(ref2), rtol=5e-3, atol=5e-3)

    # 3) bf16 input path (half the HBM bytes); compare against the same rounded inputs
    x3 = x.astype(jnp.bfloat16)
    out3 = jax.block_until_ready(video_segmentation_head(x3, conv_w, conv_b, L))
    ref3 = _reference(x3.astype(jnp.float32),
                      conv_w.astype(jnp.bfloat16).astype(jnp.float32), conv_b, L)
    np.testing.assert_allclose(np.asarray(out3), np.asarray(ref3), rtol=2e-2, atol=2e-2)

    print("KERNEL_OK")
</pallas_src>

<mosaic_0001>
module attributes {stable_mosaic.version = 11 : i64} {
  func.func @_kernel_folded(%arg0: i32, %arg1: i32, %arg2: memref<1x2048x256xf32, #tpu.memory_space<vmem>>, %arg3: memref<3x2048xf32, #tpu.memory_space<vmem>>, %arg4: memref<1xf32, #tpu.memory_space<smem>>, %arg5: memref<3x256x16xf32, #tpu.memory_space<vmem>>, %arg6: memref<1x1x16xf32, #tpu.memory_space<vmem>>) attributes {dimension_semantics = [#tpu.dimension_semantics<parallel>, #tpu.dimension_semantics<arbitrary>], iteration_bounds = array<i64: 2, 1>, scalar_prefetch = 0 : i64, scratch_operands = 0 : i64, tpu.core_type = #tpu.core_type<tc>, window_params = [{transform_indices = @transform_0, window_bounds = array<i64: 1, 2048, 256>}, {pipeline_mode = #tpu.pipeline_mode<synchronous>, transform_indices = @transform_1, window_bounds = array<i64: 3, 2048>}, {transform_indices = @transform_2, window_bounds = array<i64: 1>}, {transform_indices = @transform_3, window_bounds = array<i64: 3, 256, 16>}, {transform_indices = @transform_4, window_bounds = array<i64: 1, 1, 16>}]} {
    %c0_i32 = arith.constant 0 : i32
    %0 = arith.cmpi eq, %arg1, %c0_i32 : i32
    %1 = arith.extui %0 : i1 to i32
    %c0_i32_0 = arith.constant 0 : i32
    %2 = arith.cmpi ne, %1, %c0_i32_0 : i32
    scf.if %2 {
      %cst_23 = arith.constant 0.000000e+00 : f32
      %30 = vector.broadcast %cst_23 : f32 to vector<1x16xf32>
      %c0_24 = arith.constant 0 : index
      %c0_25 = arith.constant 0 : index
      %c0_26 = arith.constant 0 : index
      %31 = vector.load %arg6[%c0_24, %c0_25, %c0_26] : memref<1x1x16xf32, #tpu.memory_space<vmem>>, vector<1x1x16xf32>
      %32 = vector.shape_cast %31 : vector<1x1x16xf32> to vector<1x16xf32>
      %33 = vector.shape_cast %30 : vector<1x16xf32> to vector<1x1x16xf32>
      tpu.vector_store %arg6[%c0_24, %c0_25, %c0_26], %33 {strides = array<i32>} : memref<1x1x16xf32, #tpu.memory_space<vmem>>, vector<1x1x16xf32>,
    } else {
    }
    %c0 = arith.constant 0 : index
    %c0_1 = arith.constant 0 : index
    %3 = vector.load %arg3[%c0, %c0_1] : memref<3x2048xf32, #tpu.memory_space<vmem>>, vector<3x2048xf32>
    %c0_2 = arith.constant 0 : index
    %c0_3 = arith.constant 0 : index
    %c0_4 = arith.constant 0 : index
    %4 = vector.load %arg2[%c0_2, %c0_3, %c0_4] : memref<1x2048x256xf32, #tpu.memory_space<vmem>>, vector<1x2048x256xf32>
    %5 = vector.shape_cast %4 : vector<1x2048x256xf32> to vector<2048x256xf32>
    %cst = arith.constant dense<0.000000e+00> : vector<3x256xf32>
    %6 = tpu.matmul %3, %5, %cst {dimension_numbers = #tpu.dot_dimension_numbers<[1], [0], [0], [1], [0, 0, 1, 1], [], []>} : vector<3x2048xf32>, vector<2048x256xf32>, vector<3x256xf32> -> vector<3x256xf32>
    %7 = vector.extract_strided_slice %6 {offsets = [0, 0], sizes = [1, 256], strides = [1, 1]} : vector<3x256xf32> to vector<1x256xf32>
    %c0_5 = arith.constant 0 : index
    %c0_6 = arith.constant 0 : index
    %c0_7 = arith.constant 0 : index
    %8 = vector.load %arg5[%c0_5, %c0_6, %c0_7] : memref<3x256x16xf32, #tpu.memory_space<vmem>>, vector<1x256x16xf32>
    %9 = vector.shape_cast %8 : vector<1x256x16xf32> to vector<256x16xf32>
    %cst_8 = arith.constant dense<0.000000e+00> : vector<1x16xf32>
    %10 = tpu.matmul %7, %9, %cst_8 {dimension_numbers = #tpu.dot_dimension_numbers<[1], [0], [0], [1], [0, 0, 1, 1], [], []>} : vector<1x256xf32>, vector<256x16xf32>, vector<1x16xf32> -> vector<1x16xf32>
    %11 = vector.extract_strided_slice %6 {offsets = [1, 0], sizes = [1, 256], strides = [1, 1]} : vector<3x256xf32> to vector<1x256xf32>
    %c1 = arith.constant 1 : index
    %c0_9 = arith.constant 0 : index
    %c0_10 = arith.constant 0 : index
    %12 = vector.load %arg5[%c1, %c0_9, %c0_10] : memref<3x256x16xf32, #tpu.memory_space<vmem>>, vector<1x256x16xf32>
    %13 = vector.shape_cast %12 : vector<1x256x16xf32> to vector<256x16xf32>
    %cst_11 = arith.constant dense<0.000000e+00> : vector<1x16xf32>
    %14 = tpu.matmul %11, %13, %cst_11 {dimension_numbers = #tpu.dot_dimension_numbers<[1], [0], [0], [1], [0, 0, 1, 1], [], []>} : vector<1x256xf32>, vector<256x16xf32>, vector<1x16xf32> -> vector<1x16xf32>
    %15 = arith.addf %10, %14 : vector<1x16xf32>
    %16 = vector.extract_strided_slice %6 {offsets = [2, 0], sizes = [1, 256], strides = [1, 1]} : vector<3x256xf32> to vector<1x256xf32>
    %c2 = arith.constant 2 : index
    %c0_12 = arith.constant 0 : index
    %c0_13 = arith.constant 0 : index
    %17 = vector.load %arg5[%c2, %c0_12, %c0_13] : memref<3x256x16xf32, #tpu.memory_space<vmem>>, vector<1x256x16xf32>
    %18 = vector.shape_cast %17 : vector<1x256x16xf32> to vector<256x16xf32>
    %cst_14 = arith.constant dense<0.000000e+00> : vector<1x16xf32>
    %19 = tpu.matmul %16, %18, %cst_14 {dimension_numbers = #tpu.dot_dimension_numbers<[1], [0], [0], [1], [0, 0, 1, 1], [], []>} : vector<1x256xf32>, vector<256x16xf32>, vector<1x16xf32> -> vector<1x16xf32>
    %20 = arith.addf %15, %19 : vector<1x16xf32>
    %c0_15 = arith.constant 0 : index
    %c0_16 = arith.constant 0 : index
    %c0_17 = arith.constant 0 : index
    %21 = vector.load %arg6[%c0_15, %c0_16, %c0_17] : memref<1x1x16xf32, #tpu.memory_space<vmem>>, vector<1x1x16xf32>
    %22 = vector.shape_cast %21 : vector<1x1x16xf32> to vector<1x16xf32>
    %23 = arith.addf %22, %20 : vector<1x16xf32>
    %c0_18 = arith.constant 0 : index
    %c0_19 = arith.constant 0 : index
    %c0_20 = arith.constant 0 : index
    %24 = vector.load %arg6[%c0_18, %c0_19, %c0_20] : memref<1x1x16xf32, #tpu.memory_space<vmem>>, vector<1x1x16xf32>
    %25 = vector.shape_cast %24 : vector<1x1x16xf32> to vector<1x16xf32>
    %26 = vector.shape_cast %23 : vector<1x16xf32> to vector<1x1x16xf32>
    tpu.vector_store %arg6[%c0_18, %c0_19, %c0_20], %26 {strides = array<i32>} : memref<1x1x16xf32, #tpu.memory_space<vmem>>, vector<1x1x16xf32>,
    %c0_i32_21 = arith.constant 0 : i32
    %27 = arith.cmpi eq, %arg1, %c0_i32_21 : i32
    %28 = arith.extui %27 : i1 to i32
    %c0_i32_22 = arith.constant 0 : i32
    %29 = arith.cmpi ne, %28, %c0_i32_22 : i32
    scf.if %29 {
      %c0_23 = arith.constant 0 : index
      %c0_24 = arith.constant 0 : index
      %c0_25 = arith.constant 0 : index
      %30 = vector.load %arg6[%c0_23, %c0_24, %c0_25] : memref<1x1x16xf32, #tpu.memory_space<vmem>>, vector<1x1x16xf32>
      %31 = vector.shape_cast %30 : vector<1x1x16xf32> to vector<1x16xf32>
      %c0_26 = arith.constant 0 : index
      %32 = memref.load %arg4[%c0_26] : memref<1xf32, #tpu.memory_space<smem>>
      %33 = vector.broadcast %32 : f32 to vector<1x16xf32>
      %34 = arith.addf %31, %33 : vector<1x16xf32>
      %c0_27 = arith.constant 0 : index
      %c0_28 = arith.constant 0 : index
      %c0_29 = arith.constant 0 : index
      %35 = vector.load %arg6[%c0_27, %c0_28, %c0_29] : memref<1x1x16xf32, #tpu.memory_space<vmem>>, vector<1x1x16xf32>
      %36 = vector.shape_cast %35 : vector<1x1x16xf32> to vector<1x16xf32>
      %37 = vector.shape_cast %34 : vector<1x16xf32> to vector<1x1x16xf32>
      tpu.vector_store %arg6[%c0_27, %c0_28, %c0_29], %37 {strides = array<i32>} : memref<1x1x16xf32, #tpu.memory_space<vmem>>, vector<1x1x16xf32>,
    } else {
    }
    return
  }
  func.func @transform_0(%arg0: i32, %arg1: i32) -> (i32, i32, i32) {
    %c0_i32 = arith.constant 0 : i32
    %c0_i32_0 = arith.constant 0 : i32
    return %arg0, %c0_i32, %arg1 : i32, i32, i32
  }
  func.func @transform_1(%arg0: i32, %arg1: i32) -> (i32, i32) {
    %c0_i32 = arith.constant 0 : i32
    %c0_i32_0 = arith.constant 0 : i32
    %c0_i32_1 = arith.constant 0 : i32
    return %c0_i32, %c0_i32_0 : i32, i32
  }
  func.func @transform_2(%arg0: i32, %arg1: i32) -> i32 {
    %c0_i32 = arith.constant 0 : i32
    %c0_i32_0 = arith.constant 0 : i32
    return %c0_i32 : i32
  }
  func.func @transform_3(%arg0: i32, %arg1: i32) -> (i32, i32, i32) {
    %c0_i32 = arith.constant 0 : i32
    %c0_i32_0 = arith.constant 0 : i32
    %c0_i32_1 = arith.constant 0 : i32
    return %c0_i32, %arg1, %c0_i32_0 : i32, i32, i32
  }
  func.func @transform_4(%arg0: i32, %arg1: i32) -> (i32, i32, i32) {
    %c0_i32 = arith.constant 0 : i32
    %c0_i32_0 = arith.constant 0 : i32
    %c0_i32_1 = arith.constant 0 : i32
    return %arg0, %c0_i32, %c0_i32_0 : i32, i32, i32
  }
}

</mosaic_0001>

<llo_original>
// kernel: tpu_custom_call.1
$region0: #{tpu_custom_call.1}
  #allocation0 [shape = 'u32[]', space=smem, size = 0x4, offset = 0x4, fixed_abs, tag = 'smem constant byte address 0x4 - core index']
  #allocation1 [shape = 'u32[144,128]{1,0:T(1,128)}', space=vmem, size = 0x12000, scoped, tag = 'internal scratch']
  #allocation2 [shape = 'f32[1]{0:T(128)S(6)}', space=smem, size = 0x200, scoped, tag = 'scoped memory for tpu_custom_call.1']
  %s0 = inlined_call_operand.hbm [shape: f32[2,2048,256], index: 0, kind: input, shape index: {}]
  %s1 = inlined_call_operand.hbm [shape: f32[3,2048], index: 1, kind: input, shape index: {}]
  %s2 = inlined_call_operand.<no memory space> [shape: f32[1], index: 2, kind: input, shape index: {}]
  %s3 = inlined_call_operand.vmem [shape: f32[3,256,16], index: 3, kind: input, shape index: {}]
  %s4 = inlined_call_operand.hbm [shape: f32[2,1,16], index: 4, kind: output, shape index: {}]
  %s5 = sld [smem:[#allocation0]]
  $region65: #{tpu_custom_call.1} parent=0
    _
  %s7 = ssub.s32 1, %s5
  %s8 = scalar_select 0, %s7, %s5
  %9 = sst [smem:[#allocation2]] %s2
  $region1: #{tpu_custom_call.1} parent=0
    #allocation3 [shape = 'u8[4194304]{0}', space=vmem, size = 0x400000, scoped, tag = 'input window, operand 0']
    #allocation4 [shape = 's32[2]{0}', space=sflag, size = 0x8, scoped, tag = 'scoped memory for tpu_custom_call.1']
    #allocation5 [shape = 's32[2]{0}', space=sflag, size = 0x8, scoped, tag = 'scoped memory for tpu_custom_call.1']
    #allocation6 [shape = 'u8[32768]{0}', space=vmem, size = 0x8000, scoped, tag = 'input window, operand 1, single buffered']
    #allocation7 [shape = 's32[1]{0}', space=sflag, size = 0x4, scoped, tag = 'scoped memory for tpu_custom_call.1']
    #allocation8 [shape = 'u8[1024]{0}', space=vmem, size = 0x400, scoped, tag = 'output window, operand 0']
    %10 = vsyncpa [#allocation4], 0
    %s11 = scalar_lea.sflag [#allocation4], 1
    %12 = vsyncpa %s11, 0
    %13 = vsyncpa [#allocation7], 0
    %14 = vsyncpa [#allocation5], 0
    %s15 = scalar_lea.sflag [#allocation5], 1
    %16 = vsyncpa %s15, 0
    loop: start=0, step=1, limit=4
    $region2: #{tpu_custom_call.1} parent=1 // loop_pre_header
      _
    $region3: #{tpu_custom_call.1} parent=1 // loop_header
      %s18 = sphi 0, %s22
      %p19 = scmp.ge.s32.totalorder %s18, 4
      %s25 = sphi 0, %s37
      %s26 = sphi 0, %s33
      %s27 = sphi 0, %s25
      %s28 = sphi 0, %s26
      %s29 = sphi 0, %s27
      %s30 = sphi 0, %s28
      %s42 = sphi 0, %s44
      %s45 = sphi 0, %s42
      %s46 = sphi 0, %s45
      %s62 = sphi 0, %s46
      %s66 = sphi 0, %s66
      %s68 = sphi 0, %s66
      %s69 = sphi 0, %s68
      %s83 = sphi 0, %s69
      %s87 = sphi 0, %s87
      %s89 = sphi 0, %s87
      %s90 = sphi 0, %s89
      %s104 = sphi 0, %s90
      %s110 = sphi 0, %s112
      %s113 = sphi 0, %s110
      %s114 = sphi 0, %s113
      %s130 = sphi 0, %s114
      %s136 = sphi 0, %s138
      %s139 = sphi 0, %s136
      %s140 = sphi 0, %s139
      %s156 = sphi 0, %s140
    $region4: #{tpu_custom_call.1} parent=1 // loop_header_branch
      %21 = sbr.rel (%p19) target = $region8
    $region5: #{tpu_custom_call.1} parent=1 // loop_body
      %s23 = ssub.s32 %s18, 1
      %s24 = ssub.s32 %s18, 2
      %s31 = sadd.s32 1, %s26
      %p32 = scmp.ge.s32.totalorder %s31, 1
      %s33 = scalar_select %p32, 0, %s31
      %s34 = sadd.s32 1, %s25
      %s35 = scalar_select %p32, %s34, %s25
      %p36 = scmp.ge.s32.totalorder %s35, 2
      %s37 = scalar_select %p36, 0, %s35
      %s38 = ssub.s32 %s25, %s37
      %s39 = ssub.s32 %s26, %s33
      %s40 = sor.u32 %s38, %s39
      %p41 = scmp.eq.s32.totalorder %s40, 0
      %s43 = sadd.s32 %s42, 1
      %s44 = scalar_select %p41, %s42, %s43
      %p47 = pneg %p41
      %p48 = scmp.eq.s32.totalorder %s18, 1
      %p49 = por %p47, %p48
      %p50 = scmp.ne.s32.totalorder %s42, %s45
      %p51 = scmp.eq.s32.totalorder %s18, 0
      %p52 = por %p50, %p51
      %p53 = scmp.ne.s32.totalorder %s42, %s45
      %p54 = scmp.eq.s32.totalorder %s23, 1
      %p55 = por %p53, %p54
      %p56 = scmp.ne.s32.totalorder %s45, %s46
      %p57 = scmp.eq.s32.totalorder %s23, 0
      %p58 = por %p56, %p57
      %p59 = scmp.ne.s32.totalorder %s45, %s46
      %p60 = scmp.eq.s32.totalorder %s24, 1
      %p61 = por %p59, %p60
      %p63 = scmp.ne.s32.totalorder %s46, %s62
      %p64 = scmp.eq.s32.totalorder %s24, 0
      %p65 = por %p63, %p64
      %s67 = sadd.s32 %s66, 1
      %p70 = scmp.eq.s32.totalorder %s18, 1
      %p71 = scmp.ne.s32.totalorder %s66, %s68
      %p72 = scmp.eq.s32.totalorder %s18, 0
      %p73 = por %p71, %p72
      %p74 = scmp.ne.s32.totalorder %s66, %s68
      %p75 = scmp.eq.s32.totalorder %s23, 1
      %p76 = por %p74, %p75
      %p77 = scmp.ne.s32.totalorder %s68, %s69
      %p78 = scmp.eq.s32.totalorder %s23, 0
      %p79 = por %p77, %p78
      %p80 = scmp.ne.s32.totalorder %s68, %s69
      %p81 = scmp.eq.s32.totalorder %s24, 1
      %p82 = por %p80, %p81
      %p84 = scmp.ne.s32.totalorder %s69, %s83
      %p85 = scmp.eq.s32.totalorder %s24, 0
      %p86 = por %p84, %p85
      %s88 = sadd.s32 %s87, 1
      %p91 = scmp.eq.s32.totalorder %s18, 1
      %p92 = scmp.ne.s32.totalorder %s87, %s89
      %p93 = scmp.eq.s32.totalorder %s18, 0
      %p94 = por %p92, %p93
      %p95 = scmp.ne.s32.totalorder %s87, %s89
      %p96 = scmp.eq.s32.totalorder %s23, 1
      %p97 = por %p95, %p96
      %p98 = scmp.ne.s32.totalorder %s89, %s90
      %p99 = scmp.eq.s32.totalorder %s23, 0
      %p100 = por %p98, %p99
      %p101 = scmp.ne.s32.totalorder %s89, %s90
      %p102 = scmp.eq.s32.totalorder %s24, 1
      %p103 = por %p101, %p102
      %p105 = scmp.ne.s32.totalorder %s90, %s104
      %p106 = scmp.eq.s32.totalorder %s24, 0
      %p107 = por %p105, %p106
      %s108 = ssub.s32 %s26, %s33
      %p109 = scmp.eq.s32.totalorder %s108, 0
      %s111 = sadd.s32 %s110, 1
      %s112 = scalar_select %p109, %s110, %s111
      %p115 = pneg %p109
      %p116 = scmp.eq.s32.totalorder %s18, 1
      %p117 = por %p115, %p116
      %p118 = scmp.ne.s32.totalorder %s110, %s113
      %p119 = scmp.eq.s32.totalorder %s18, 0
      %p120 = por %p118, %p119
      %p121 = scmp.ne.s32.totalorder %s110, %s113
      %p122 = scmp.eq.s32.totalorder %s23, 1
      %p123 = por %p121, %p122
      %p124 = scmp.ne.s32.totalorder %s113, %s114
      %p125 = scmp.eq.s32.totalorder %s23, 0
      %p126 = por %p124, %p125
      %p127 = scmp.ne.s32.totalorder %s113, %s114
      %p128 = scmp.eq.s32.totalorder %s24, 1
      %p129 = por %p127, %p128
      %p131 = scmp.ne.s32.totalorder %s114, %s130
      %p132 = scmp.eq.s32.totalorder %s24, 0
      %p133 = por %p131, %p132
      %s134 = ssub.s32 %s25, %s37
      %p135 = scmp.eq.s32.totalorder %s134, 0
      %s137 = sadd.s32 %s136, 1
      %s138 = scalar_select %p135, %s136, %s137
      %p141 = pneg %p135
      %p142 = scmp.eq.s32.totalorder %s18, 1
      %p143 = por %p141, %p142
      %p144 = scmp.ne.s32.totalorder %s136, %s139
      %p145 = scmp.eq.s32.totalorder %s18, 0
      %p146 = por %p144, %p145
      %p147 = scmp.ne.s32.totalorder %s136, %s139
      %p148 = scmp.eq.s32.totalorder %s23, 1
      %p149 = por %p147, %p148
      %p150 = scmp.ne.s32.totalorder %s139, %s140
      %p151 = scmp.eq.s32.totalorder %s23, 0
      %p152 = por %p150, %p151
      %p153 = scmp.ne.s32.totalorder %s139, %s140
      %p154 = scmp.eq.s32.totalorder %s24, 1
      %p155 = por %p153, %p154
      %p157 = scmp.ne.s32.totalorder %s140, %s156
      %p158 = scmp.eq.s32.totalorder %s24, 0
      %p159 = por %p157, %p158
      %p160 = scmp.le.s32.totalorder 1, %s18
      %p161 = scmp.lt.s32.totalorder %s18, 3
      %p162 = pnand %p160, %p161
      %p163 = pneg %p162
      // Predicated region
      $region9: #{tpu_custom_call.1} parent=5 // pred_check
        _
      $region10: #{tpu_custom_call.1} parent=5 // pred_check_branch
        %165 = sbr.rel (%p162) target = $region12
      $region11: #{tpu_custom_call.1} parent=5 // pred_region
        %s166 = ssub.s32 %s18, 1
        // Predicated region
        $region13: #{tpu_custom_call.1} parent=11 // pred_check
          %p167 = pneg %p79
        $region14: #{tpu_custom_call.1} parent=11 // pred_check_branch
          %169 = sbr.rel (%p167) target = $region16
        $region15: #{tpu_custom_call.1} parent=11 // pred_region
          %s171 = ssub.s32 1024, 1024
          %172 = vsyncadd [#allocation7], %s171
          %s174 = sshll.u32 [#allocation6], 4
          %s175 = int_to_ptr.vmem [resolvable:$true] %s174
          %177 = dma.hbm_to_vmem [thread:$0]  %s1, 1024, %s175, [#allocation7]
        $region16: #{tpu_custom_call.1} parent=11 // pred_fallthru
          _
        // Predicated region
        $region17: #{tpu_custom_call.1} parent=11 // pred_check
          %p178 = pneg %p100
        $region18: #{tpu_custom_call.1} parent=11 // pred_check_branch
          %180 = sbr.rel (%p178) target = $region20
        $region19: #{tpu_custom_call.1} parent=11 // pred_region
          _
        $region20: #{tpu_custom_call.1} parent=11 // pred_fallthru
          _
        // Predicated region
        $region21: #{tpu_custom_call.1} parent=11 // pred_check
          %p181 = pneg %p126
        $region22: #{tpu_custom_call.1} parent=11 // pred_check_branch
          %183 = sbr.rel (%p181) target = $region24
        $region23: #{tpu_custom_call.1} parent=11 // pred_region
          %s184 = smul.u32 32, %s28
          %p185 = scmp.lt.s32.totalorder %s184, 31
          %s186 = scalar_select %p185, %s184, 31
          %s187 = smul.addr %s186, 8
          %s188 = scalar_lea.vmem %s3, %s187
          %s189 = smul.u32 32, %s28
        $region24: #{tpu_custom_call.1} parent=11 // pred_fallthru
          _
      $region12: #{tpu_custom_call.1} parent=5 // pred_fallthru
        _
      %p190 = scmp.lt.s32.totalorder %s18, 2
      // Predicated region
      $region25: #{tpu_custom_call.1} parent=5 // pred_check
        %p191 = pneg %p190
      $region26: #{tpu_custom_call.1} parent=5 // pred_check_branch
        %193 = sbr.rel (%p191) target = $region28
      $region27: #{tpu_custom_call.1} parent=5 // pred_region
        // Predicated region
        $region29: #{tpu_custom_call.1} parent=27 // pred_check
          %p194 = pneg %p52
        $region30: #{tpu_custom_call.1} parent=27 // pred_check_branch
          %196 = sbr.rel (%p194) target = $region32
        $region31: #{tpu_custom_call.1} parent=27 // pred_region
          %s197 = sand.u32 %s42, 1
          %s198 = scalar_lea.sflag [#allocation4], %s197
          %s199 = sand.u32 %s42, 1
          %s200 = smul.addr %s199, 4096
          %s201 = scalar_lea.vmem [#allocation3], %s200
          %s202 = smul.u32 2, %s26
          %s204 = ssub.s32 65536, 65536
          %205 = vsyncadd %s198, %s204
          %s206 = smul.addr %s25, 512
          %s207 = sadd.s32 %s202, %s206
          %s208 = smul.addr %s207, 128
          %s209 = scalar_lea.hbm %s0, %s208
          %s210 = sshll.u32 %s201, 4
          %s211 = int_to_ptr.vmem [resolvable:$true] %s210
          %216 = dma.hbm_to_vmem [thread:$0]  %s209, 65536, %s211, %s198, 256, 256, 16
        $region32: #{tpu_custom_call.1} parent=27 // pred_fallthru
          _
      $region28: #{tpu_custom_call.1} parent=5 // pred_fallthru
        _
      %p217 = scmp.le.s32.totalorder 1, %s18
      %p218 = scmp.lt.s32.totalorder %s18, 3
      %p219 = pnand %p217, %p218
      %p220 = pneg %p219
      // Predicated region
      $region33: #{tpu_custom_call.1} parent=5 // pred_check
        _
      $region34: #{tpu_custom_call.1} parent=5 // pred_check_branch
        %222 = sbr.rel (%p219) target = $region36
      $region35: #{tpu_custom_call.1} parent=5 // pred_region
        %s223 = ssub.s32 %s18, 1
        %s224 = sand.u32 %s45, 1
        %s225 = scalar_lea.sflag [#allocation4], %s224
        %s226 = sand.u32 %s45, 1
        %s227 = smul.addr %s226, 4096
        %s228 = scalar_lea.vmem [#allocation3], %s227
        // Predicated region
        $region37: #{tpu_custom_call.1} parent=35 // pred_check
          %p229 = pneg %p58
        $region38: #{tpu_custom_call.1} parent=35 // pred_check_branch
          %231 = sbr.rel (%p229) target = $region40
        $region39: #{tpu_custom_call.1} parent=35 // pred_region
          %232 = dma.done %s225, 65536
        $region40: #{tpu_custom_call.1} parent=35 // pred_fallthru
          _
        // Predicated region
        $region41: #{tpu_custom_call.1} parent=35 // pred_check
          %p233 = pneg %p79
        $region42: #{tpu_custom_call.1} parent=35 // pred_check_branch
          %235 = sbr.rel (%p233) target = $region44
        $region43: #{tpu_custom_call.1} parent=35 // pred_region
          %236 = dma.done [#allocation7], 1024
        $region44: #{tpu_custom_call.1} parent=35 // pred_fallthru
          _
        %s237 = sand.u32 %s45, 1
        %s238 = scalar_lea.sflag [#allocation4], %s237
        %s239 = sand.u32 %s45, 1
        %s240 = smul.addr %s239, 4096
        %s241 = scalar_lea.vmem [#allocation3], %s240
        %p242 = pneg %p58
        %p243 = pneg %p55
        %p244 = pneg %p79
        %p245 = pneg %p76
        %p246 = pneg %p100
        %p247 = pneg %p97
        %s248 = smul.u32 32, %s28
        %p249 = scmp.lt.s32.totalorder %s248, 31
        %s250 = scalar_select %p249, %s248, 31
        %s251 = smul.addr %s250, 8
        %s252 = scalar_lea.vmem %s3, %s251
        %p253 = pneg %p126
        %p254 = pneg %p123
        %p255 = pneg %p152
        %p256 = pneg %p149
        %s257 = sand.u32 %s139, 1
        %s258 = scalar_lea.sflag [#allocation5], %s257
        %s259 = sand.u32 %s139, 1
        %s260 = scalar_lea.vmem [#allocation8], %s259
        %s261 = smul.u32 2, %s28
        %s262 = smul.u32 32, %s28
        %p263 = scmp.lt.s32.totalorder %s262, 31
        %s264 = scalar_select %p263, %s262, 31
        %s265 = smul.addr %s264, 8
        %s266 = scalar_lea.vmem %s3, %s265
        %s267 = smul.u32 32, %s28
        %p268 = scmp.eq.s32.totalorder %s28, 0
        // Predicated region
        $region45: #{tpu_custom_call.1} parent=35 // pred_check
          %p269 = pneg %p268
        $region46: #{tpu_custom_call.1} parent=35 // pred_check_branch
          %271 = sbr.rel (%p269) target = $region48
        $region47: #{tpu_custom_call.1} parent=35 // pred_region
          %vm272 = vcmask 122880
          %273 = vst.msk [vmem:[%s260] sm:$0x1] %vm272, 0.0
        $region48: #{tpu_custom_call.1} parent=35 // pred_fallthru
          _
        %v274 = vld [vmem:[#allocation6] sm:$0x77]
        %v275 = vld [vmem:[#allocation6 + $0x8] sm:$0x77]
        %v276 = vld [vmem:[#allocation6 + $0x10] sm:$0x77]
        %v277 = vld [vmem:[#allocation6 + $0x18] sm:$0x77]
        %v278 = vld [vmem:[#allocation6 + $0x20] sm:$0x77]
        %v279 = vld [vmem:[#allocation6 + $0x28] sm:$0x77]
        %v280 = vld [vmem:[#allocation6 + $0x30] sm:$0x77]
        %v281 = vld [vmem:[#allocation6 + $0x38] sm:$0x77]
        %v282 = vld [vmem:[%s228] sm:$0xff]
        %v283 = vld [vmem:[%s228 + $0x8] sm:$0xff]
        %v284 = vld [vmem:[%s228 + $0x10] sm:$0xff]
        %v285 = vld [vmem:[%s228 + $0x18] sm:$0xff]
        %v286 = vld [vmem:[%s228 + $0x20] sm:$0xff]
        %v287 = vld [vmem:[%s228 + $0x28] sm:$0xff]
        %v288 = vld [vmem:[%s228 + $0x30] sm:$0xff]
        %v289 = vld [vmem:[%s228 + $0x38] sm:$0xff]
        %v290 = vld [vmem:[%s228 + $0x40] sm:$0xff]
        %v291 = vld [vmem:[%s228 + $0x48] sm:$0xff]
        %v292 = vld [vmem:[%s228 + $0x50] sm:$0xff]
        %v293 = vld [vmem:[%s228 + $0x58] sm:$0xff]
        %v294 = vld [vmem:[%s228 + $0x60] sm:$0xff]
        %v295 = vld [vmem:[%s228 + $0x68] sm:$0xff]
        %v296 = vld [vmem:[%s228 + $0x70] sm:$0xff]
        %v297 = vld [vmem:[%s228 + $0x78] sm:$0xff]
        %v298 = vld [vmem:[%s228 + $0x80] sm:$0xff]
        %v299 = vld [vmem:[%s228 + $0x88] sm:$0xff]
        %v300 = vld [vmem:[%s228 + $0x90] sm:$0xff]
        %v301 = vld [vmem:[%s228 + $0x98] sm:$0xff]
        %v302 = vld [vmem:[%s228 + $0xa0] sm:$0xff]
        %v303 = vld [vmem:[%s228 + $0xa8] sm:$0xff]
        %v304 = vld [vmem:[%s228 + $0xb0] sm:$0xff]
        %v305 = vld [vmem:[%s228 + $0xb8] sm:$0xff]
        %v306 = vld [vmem:[%s228 + $0xc0] sm:$0xff]
        %v307 = vld [vmem:[%s228 + $0xc8] sm:$0xff]
        %v308 = vld [vmem:[%s228 + $0xd0] sm:$0xff]
        %v309 = vld [vmem:[%s228 + $0xd8] sm:$0xff]
        %v310 = vld [vmem:[%s228 + $0xe0] sm:$0xff]
        %v311 = vld [vmem:[%s228 + $0xe8] sm:$0xff]
        %v312 = vld [vmem:[%s228 + $0xf0] sm:$0xff]
        %v313 = vld [vmem:[%s228 + $0xf8] sm:$0xff]
        %v314 = vld [vmem:[%s228 + $0x100] sm:$0xff]
        %v315 = vld [vmem:[%s228 + $0x108] sm:$0xff]
        %v316 = vld [vmem:[%s228 + $0x110] sm:$0xff]
        %v317 = vld [vmem:[%s228 + $0x118] sm:$0xff]
        %v318 = vld [vmem:[%s228 + $0x120] sm:$0xff]
        %v319 = vld [vmem:[%s228 + $0x128] sm:$0xff]
        %v320 = vld [vmem:[%s228 + $0x130] sm:$0xff]
        %v321 = vld [vmem:[%s228 + $0x138] sm:$0xff]
        %v322 = vld [vmem:[%s228 + $0x140] sm:$0xff]
        %v323 = vld [vmem:[%s228 + $0x148] sm:$0xff]
        %v324 = vld [vmem:[%s228 + $0x150] sm:$0xff]
        %v325 = vld [vmem:[%s228 + $0x158] sm:$0xff]
        %v326 = vld [vmem:[%s228 + $0x160] sm:$0xff]
        %v327 = vld [vmem:[%s228 + $0x168] sm:$0xff]
        %v328 = vld [vmem:[%s228 + $0x170] sm:$0xff]
        %v329 = vld [vmem:[%s228 + $0x178] sm:$0xff]
        %v330 = vld [vmem:[%s228 + $0x180] sm:$0xff]
        %v331 = vld [vmem:[%s228 + $0x188] sm:$0xff]
        %v332 = vld [vmem:[%s228 + $0x190] sm:$0xff]
        %v333 = vld [vmem:[%s228 + $0x198] sm:$0xff]
        %v334 = vld [vmem:[%s228 + $0x1a0] sm:$0xff]
        %v335 = vld [vmem:[%s228 + $0x1a8] sm:$0xff]
        %v336 = vld [vmem:[%s228 + $0x1b0] sm:$0xff]
        %v337 = vld [vmem:[%s228 + $0x1b8] sm:$0xff]
        %v338 = vld [vmem:[%s228 + $0x1c0] sm:$0xff]
        %v339 = vld [vmem:[%s228 + $0x1c8] sm:$0xff]
        %v340 = vld [vmem:[%s228 + $0x1d0] sm:$0xff]
        %v341 = vld [vmem:[%s228 + $0x1d8] sm:$0xff]
        %v342 = vld [vmem:[%s228 + $0x1e0] sm:$0xff]
        %v343 = vld [vmem:[%s228 + $0x1e8] sm:$0xff]
        %v344 = vld [vmem:[%s228 + $0x1f0] sm:$0xff]
        %v345 = vld [vmem:[%s228 + $0x1f8] sm:$0xff]
        %v346 = vld [vmem:[%s228 + $0x200] sm:$0xff]
        %v347 = vld [vmem:[%s228 + $0x208] sm:$0xff]
        %v348 = vld [vmem:[%s228 + $0x210] sm:$0xff]
        %v349 = vld [vmem:[%s228 + $0x218] sm:$0xff]
        %v350 = vld [vmem:[%s228 + $0x220] sm:$0xff]
        %v351 = vld [vmem:[%s228 + $0x228] sm:$0xff]
        %v352 = vld [vmem:[%s228 + $0x230] sm:$0xff]
        %v353 = vld [vmem:[%s228 + $0x238] sm:$0xff]
        %v354 = vld [vmem:[%s228 + $0x240] sm:$0xff]
        %v355 = vld [vmem:[%s228 + $0x248] sm:$0xff]
        %v356 = vld [vmem:[%s228 + $0x250] sm:$0xff]
        %v357 = vld [vmem:[%s228 + $0x258] sm:$0xff]
        %v358 = vld [vmem:[%s228 + $0x260] sm:$0xff]
        %v359 = vld [vmem:[%s228 + $0x268] sm:$0xff]
        %v360 = vld [vmem:[%s228 + $0x270] sm:$0xff]
        %v361 = vld [vmem:[%s228 + $0x278] sm:$0xff]
        %v362 = vld [vmem:[%s228 + $0x280] sm:$0xff]
        %v363 = vld [vmem:[%s228 + $0x288] sm:$0xff]
        %v364 = vld [vmem:[%s228 + $0x290] sm:$0xff]
        %v365 = vld [vmem:[%s228 + $0x298] sm:$0xff]
        %v366 = vld [vmem:[%s228 + $0x2a0] sm:$0xff]
        %v367 = vld [vmem:[%s228 + $0x2a8] sm:$0xff]
        %v368 = vld [vmem:[%s228 + $0x2b0] sm:$0xff]
        %v369 = vld [vmem:[%s228 + $0x2b8] sm:$0xff]
        %v370 = vld [vmem:[%s228 + $0x2c0] sm:$0xff]
        %v371 = vld [vmem:[%s228 + $0x2c8] sm:$0xff]
        %v372 = vld [vmem:[%s228 + $0x2d0] sm:$0xff]
        %v373 = vld [vmem:[%s228 + $0x2d8] sm:$0xff]
        %v374 = vld [vmem:[%s228 + $0x2e0] sm:$0xff]
        %v375 = vld [vmem:[%s228 + $0x2e8] sm:$0xff]
        %v376 = vld [vmem:[%s228 + $0x2f0] sm:$0xff]
        %v377 = vld [vmem:[%s228 + $0x2f8] sm:$0xff]
        %v378 = vld [vmem:[%s228 + $0x300] sm:$0xff]
        %v379 = vld [vmem:[%s228 + $0x308] sm:$0xff]
        %v380 = vld [vmem:[%s228 + $0x310] sm:$0xff]
        %v381 = vld [vmem:[%s228 + $0x318] sm:$0xff]
        %v382 = vld [vmem:[%s228 + $0x320] sm:$0xff]
        %v383 = vld [vmem:[%s228 + $0x328] sm:$0xff]
        %v384 = vld [vmem:[%s228 + $0x330] sm:$0xff]
        %v385 = vld [vmem:[%s228 + $0x338] sm:$0xff]
        %v386 = vld [vmem:[%s228 + $0x340] sm:$0xff]
        %v387 = vld [vmem:[%s228 + $0x348] sm:$0xff]
        %v388 = vld [vmem:[%s228 + $0x350] sm:$0xff]
        %v389 = vld [vmem:[%s228 + $0x358] sm:$0xff]
        %v390 = vld [vmem:[%s228 + $0x360] sm:$0xff]
        %v391 = vld [vmem:[%s228 + $0x368] sm:$0xff]
        %v392 = vld [vmem:[%s228 + $0x370] sm:$0xff]
        %v393 = vld [vmem:[%s228 + $0x378] sm:$0xff]
        %v394 = vld [vmem:[%s228 + $0x380] sm:$0xff]
        %v395 = vld [vmem:[%s228 + $0x388] sm:$0xff]
        %v396 = vld [vmem:[%s228 + $0x390] sm:$0xff]
        %v397 = vld [vmem:[%s228 + $0x398] sm:$0xff]
        %v398 = vld [vmem:[%s228 + $0x3a0] sm:$0xff]
        %v399 = vld [vmem:[%s228 + $0x3a8] sm:$0xff]
        %v400 = vld [vmem:[%s228 + $0x3b0] sm:$0xff]
        %v401 = vld [vmem:[%s228 + $0x3b8] sm:$0xff]
        %v402 = vld [vmem:[%s228 + $0x3c0] sm:$0xff]
        %v403 = vld [vmem:[%s228 + $0x3c8] sm:$0xff]
        %v404 = vld [vmem:[%s228 + $0x3d0] sm:$0xff]
        %v405 = vld [vmem:[%s228 + $0x3d8] sm:$0xff]
        %v406 = vld [vmem:[%s228 + $0x3e0] sm:$0xff]
        %v407 = vld [vmem:[%s228 + $0x3e8] sm:$0xff]
        %v408 = vld [vmem:[%s228 + $0x3f0] sm:$0xff]
        %v409 = vld [vmem:[%s228 + $0x3f8] sm:$0xff]
        %v410 = vld [vmem:[%s228 + $0x400] sm:$0xff]
        %v411 = vld [vmem:[%s228 + $0x408] sm:$0xff]
        %v412 = vld [vmem:[%s228 + $0x410] sm:$0xff]
        %v413 = vld [vmem:[%s228 + $0x418] sm:$0xff]
        %v414 = vld [vmem:[%s228 + $0x420] sm:$0xff]
        %v415 = vld [vmem:[%s228 + $0x428] sm:$0xff]
        %v416 = vld [vmem:[%s228 + $0x430] sm:$0xff]
        %v417 = vld [vmem:[%s228 + $0x438] sm:$0xff]
        %v418 = vld [vmem:[%s228 + $0x440] sm:$0xff]
        %v419 = vld [vmem:[%s228 + $0x448] sm:$0xff]
        %v420 = vld [vmem:[%s228 + $0x450] sm:$0xff]
        %v421 = vld [vmem:[%s228 + $0x458] sm:$0xff]
        %v422 = vld [vmem:[%s228 + $0x460] sm:$0xff]
        %v423 = vld [vmem:[%s228 + $0x468] sm:$0xff]
        %v424 = vld [vmem:[%s228 + $0x470] sm:$0xff]
        %v425 = vld [vmem:[%s228 + $0x478] sm:$0xff]
        %v426 = vld [vmem:[%s228 + $0x480] sm:$0xff]
        %v427 = vld [vmem:[%s228 + $0x488] sm:$0xff]
        %v428 = vld [vmem:[%s228 + $0x490] sm:$0xff]
        %v429 = vld [vmem:[%s228 + $0x498] sm:$0xff]
        %v430 = vld [vmem:[%s228 + $0x4a0] sm:$0xff]
        %v431 = vld [vmem:[%s228 + $0x4a8] sm:$0xff]
        %v432 = vld [vmem:[%s228 + $0x4b0] sm:$0xff]
        %v433 = vld [vmem:[%s228 + $0x4b8] sm:$0xff]
        %v434 = vld [vmem:[%s228 + $0x4c0] sm:$0xff]
        %v435 = vld [vmem:[%s228 + $0x4c8] sm:$0xff]
        %v436 = vld [vmem:[%s228 + $0x4d0] sm:$0xff]
        %v437 = vld [vmem:[%s228 + $0x4d8] sm:$0xff]
        %v438 = vld [vmem:[%s228 + $0x4e0] sm:$0xff]
        %v439 = vld [vmem:[%s228 + $0x4e8] sm:$0xff]
        %v440 = vld [vmem:[%s228 + $0x4f0] sm:$0xff]
        %v441 = vld [vmem:[%s228 + $0x4f8] sm:$0xff]
        %v442 = vld [vmem:[%s228 + $0x500] sm:$0xff]
        %v443 = vld [vmem:[%s228 + $0x508] sm:$0xff]
        %v444 = vld [vmem:[%s228 + $0x510] sm:$0xff]
        %v445 = vld [vmem:[%s228 + $0x518] sm:$0xff]
        %v446 = vld [vmem:[%s228 + $0x520] sm:$0xff]
        %v447 = vld [vmem:[%s228 + $0x528] sm:$0xff]
        %v448 = vld [vmem:[%s228 + $0x530] sm:$0xff]
        %v449 = vld [vmem:[%s228 + $0x538] sm:$0xff]
        %v450 = vld [vmem:[%s228 + $0x540] sm:$0xff]
        %v451 = vld [vmem:[%s228 + $0x548] sm:$0xff]
        %v452 = vld [vmem:[%s228 + $0x550] sm:$0xff]
        %v453 = vld [vmem:[%s228 + $0x558] sm:$0xff]
        %v454 = vld [vmem:[%s228 + $0x560] sm:$0xff]
        %v455 = vld [vmem:[%s228 + $0x568] sm:$0xff]
        %v456 = vld [vmem:[%s228 + $0x570] sm:$0xff]
        %v457 = vld [vmem:[%s228 + $0x578] sm:$0xff]
        %v458 = vld [vmem:[%s228 + $0x580] sm:$0xff]
        %v459 = vld [vmem:[%s228 + $0x588] sm:$0xff]
        %v460 = vld [vmem:[%s228 + $0x590] sm:$0xff]
        %v461 = vld [vmem:[%s228 + $0x598] sm:$0xff]
        %v462 = vld [vmem:[%s228 + $0x5a0] sm:$0xff]
        %v463 = vld [vmem:[%s228 + $0x5a8] sm:$0xff]
        %v464 = vld [vmem:[%s228 + $0x5b0] sm:$0xff]
        %v465 = vld [vmem:[%s228 + $0x5b8] sm:$0xff]
        %v466 = vld [vmem:[%s228 + $0x5c0] sm:$0xff]
        %v467 = vld [vmem:[%s228 + $0x5c8] sm:$0xff]
        %v468 = vld [vmem:[%s228 + $0x5d0] sm:$0xff]
        %v469 = vld [vmem:[%s228 + $0x5d8] sm:$0xff]
        %v470 = vld [vmem:[%s228 + $0x5e0] sm:$0xff]
        %v471 = vld [vmem:[%s228 + $0x5e8] sm:$0xff]
        %v472 = vld [vmem:[%s228 + $0x5f0] sm:$0xff]
        %v473 = vld [vmem:[%s228 + $0x5f8] sm:$0xff]
        %v474 = vld [vmem:[%s228 + $0x600] sm:$0xff]
        %v475 = vld [vmem:[%s228 + $0x608] sm:$0xff]
        %v476 = vld [vmem:[%s228 + $0x610] sm:$0xff]
        %v477 = vld [vmem:[%s228 + $0x618] sm:$0xff]
        %v478 = vld [vmem:[%s228 + $0x620] sm:$0xff]
        %v479 = vld [vmem:[%s228 + $0x628] sm:$0xff]
        %v480 = vld [vmem:[%s228 + $0x630] sm:$0xff]
        %v481 = vld [vmem:[%s228 + $0x638] sm:$0xff]
        %v482 = vld [vmem:[%s228 + $0x640] sm:$0xff]
        %v483 = vld [vmem:[%s228 + $0x648] sm:$0xff]
        %v484 = vld [vmem:[%s228 + $0x650] sm:$0xff]
        %v485 = vld [vmem:[%s228 + $0x658] sm:$0xff]
        %v486 = vld [vmem:[%s228 + $0x660] sm:$0xff]
        %v487 = vld [vmem:[%s228 + $0x668] sm:$0xff]
        %v488 = vld [vmem:[%s228 + $0x670] sm:$0xff]
        %v489 = vld [vmem:[%s228 + $0x678] sm:$0xff]
        %v490 = vld [vmem:[%s228 + $0x680] sm:$0xff]
        %v491 = vld [vmem:[%s228 + $0x688] sm:$0xff]
        %v492 = vld [vmem:[%s228 + $0x690] sm:$0xff]
        %v493 = vld [vmem:[%s228 + $0x698] sm:$0xff]
        %v494 = vld [vmem:[%s228 + $0x6a0] sm:$0xff]
        %v495 = vld [vmem:[%s228 + $0x6a8] sm:$0xff]
        %v496 = vld [vmem:[%s228 + $0x6b0] sm:$0xff]
        %v497 = vld [vmem:[%s228 + $0x6b8] sm:$0xff]
        %v498 = vld [vmem:[%s228 + $0x6c0] sm:$0xff]
        %v499 = vld [vmem:[%s228 + $0x6c8] sm:$0xff]
        %v500 = vld [vmem:[%s228 + $0x6d0] sm:$0xff]
        %v501 = vld [vmem:[%s228 + $0x6d8] sm:$0xff]
        %v502 = vld [vmem:[%s228 + $0x6e0] sm:$0xff]
        %v503 = vld [vmem:[%s228 + $0x6e8] sm:$0xff]
        %v504 = vld [vmem:[%s228 + $0x6f0] sm:$0xff]
        %v505 = vld [vmem:[%s228 + $0x6f8] sm:$0xff]
        %v506 = vld [vmem:[%s228 + $0x700] sm:$0xff]
        %v507 = vld [vmem:[%s228 + $0x708] sm:$0xff]
        %v508 = vld [vmem:[%s228 + $0x710] sm:$0xff]
        %v509 = vld [vmem:[%s228 + $0x718] sm:$0xff]
        %v510 = vld [vmem:[%s228 + $0x720] sm:$0xff]
        %v511 = vld [vmem:[%s228 + $0x728] sm:$0xff]
        %v512 = vld [vmem:[%s228 + $0x730] sm:$0xff]
        %v513 = vld [vmem:[%s228 + $0x738] sm:$0xff]
        %v514 = vld [vmem:[%s228 + $0x740] sm:$0xff]
        %v515 = vld [vmem:[%s228 + $0x748] sm:$0xff]
        %v516 = vld [vmem:[%s228 + $0x750] sm:$0xff]
        %v517 = vld [vmem:[%s228 + $0x758] sm:$0xff]
        %v518 = vld [vmem:[%s228 + $0x760] sm:$0xff]
        %v519 = vld [vmem:[%s228 + $0x768] sm:$0xff]
        %v520 = vld [vmem:[%s228 + $0x770] sm:$0xff]
        %v521 = vld [vmem:[%s228 + $0x778] sm:$0xff]
        %v522 = vld [vmem:[%s228 + $0x780] sm:$0xff]
        %v523 = vld [vmem:[%s228 + $0x788] sm:$0xff]
        %v524 = vld [vmem:[%s228 + $0x790] sm:$0xff]
        %v525 = vld [vmem:[%s228 + $0x798] sm:$0xff]
        %v526 = vld [vmem:[%s228 + $0x7a0] sm:$0xff]
        %v527 = vld [vmem:[%s228 + $0x7a8] sm:$0xff]
        %v528 = vld [vmem:[%s228 + $0x7b0] sm:$0xff]
        %v529 = vld [vmem:[%s228 + $0x7b8] sm:$0xff]
        %v530 = vld [vmem:[%s228 + $0x7c0] sm:$0xff]
        %v531 = vld [vmem:[%s228 + $0x7c8] sm:$0xff]
        %v532 = vld [vmem:[%s228 + $0x7d0] sm:$0xff]
        %v533 = vld [vmem:[%s228 + $0x7d8] sm:$0xff]
        %v534 = vld [vmem:[%s228 + $0x7e0] sm:$0xff]
        %v535 = vld [vmem:[%s228 + $0x7e8] sm:$0xff]
        %v536 = vld [vmem:[%s228 + $0x7f0] sm:$0xff]
        %v537 = vld [vmem:[%s228 + $0x7f8] sm:$0xff]
        %v538 = vld [vmem:[%s228 + $0x800] sm:$0xff]
        %v539 = vld [vmem:[%s228 + $0x808] sm:$0xff]
        %v540 = vld [vmem:[%s228 + $0x810] sm:$0xff]
        %v541 = vld [vmem:[%s228 + $0x818] sm:$0xff]
        %v542 = vld [vmem:[%s228 + $0x820] sm:$0xff]
        %v543 = vld [vmem:[%s228 + $0x828] sm:$0xff]
        %v544 = vld [vmem:[%s228 + $0x830] sm:$0xff]
        %v545 = vld [vmem:[%s228 + $0x838] sm:$0xff]
        %v546 = vld [vmem:[%s228 + $0x840] sm:$0xff]
        %v547 = vld [vmem:[%s228 + $0x848] sm:$0xff]
        %v548 = vld [vmem:[%s228 + $0x850] sm:$0xff]
        %v549 = vld [vmem:[%s228 + $0x858] sm:$0xff]
        %v550 = vld [vmem:[%s228 + $0x860] sm:$0xff]
        %v551 = vld [vmem:[%s228 + $0x868] sm:$0xff]
        %v552 = vld [vmem:[%s228 + $0x870] sm:$0xff]
        %v553 = vld [vmem:[%s228 + $0x878] sm:$0xff]
        %v554 = vld [vmem:[%s228 + $0x880] sm:$0xff]
        %v555 = vld [vmem:[%s228 + $0x888] sm:$0xff]
        %v556 = vld [vmem:[%s228 + $0x890] sm:$0xff]
        %v557 = vld [vmem:[%s228 + $0x898] sm:$0xff]
        %v558 = vld [vmem:[%s228 + $0x8a0] sm:$0xff]
        %v559 = vld [vmem:[%s228 + $0x8a8] sm:$0xff]
        %v560 = vld [vmem:[%s228 + $0x8b0] sm:$0xff]
        %v561 = vld [vmem:[%s228 + $0x8b8] sm:$0xff]
        %v562 = vld [vmem:[%s228 + $0x8c0] sm:$0xff]
        %v563 = vld [vmem:[%s228 + $0x8c8] sm:$0xff]
        %v564 = vld [vmem:[%s228 + $0x8d0] sm:$0xff]
        %v565 = vld [vmem:[%s228 + $0x8d8] sm:$0xff]
        %v566 = vld [vmem:[%s228 + $0x8e0] sm:$0xff]
        %v567 = vld [vmem:[%s228 + $0x8e8] sm:$0xff]
        %v568 = vld [vmem:[%s228 + $0x8f0] sm:$0xff]
        %v569 = vld [vmem:[%s228 + $0x8f8] sm:$0xff]
        %v570 = vld [vmem:[%s228 + $0x900] sm:$0xff]
        %v571 = vld [vmem:[%s228 + $0x908] sm:$0xff]
        %v572 = vld [vmem:[%s228 + $0x910] sm:$0xff]
        %v573 = vld [vmem:[%s228 + $0x918] sm:$0xff]
        %v574 = vld [vmem:[%s228 + $0x920] sm:$0xff]
        %v575 = vld [vmem:[%s228 + $0x928] sm:$0xff]
        %v576 = vld [vmem:[%s228 + $0x930] sm:$0xff]
        %v577 = vld [vmem:[%s228 + $0x938] sm:$0xff]
        %v578 = vld [vmem:[%s228 + $0x940] sm:$0xff]
        %v579 = vld [vmem:[%s228 + $0x948] sm:$0xff]
        %v580 = vld [vmem:[%s228 + $0x950] sm:$0xff]
        %v581 = vld [vmem:[%s228 + $0x958] sm:$0xff]
        %v582 = vld [vmem:[%s228 + $0x960] sm:$0xff]
        %v583 = vld [vmem:[%s228 + $0x968] sm:$0xff]
        %v584 = vld [vmem:[%s228 + $0x970] sm:$0xff]
        %v585 = vld [vmem:[%s228 + $0x978] sm:$0xff]
        %v586 = vld [vmem:[%s228 + $0x980] sm:$0xff]
        %v587 = vld [vmem:[%s228 + $0x988] sm:$0xff]
        %v588 = vld [vmem:[%s228 + $0x990] sm:$0xff]
        %v589 = vld [vmem:[%s228 + $0x998] sm:$0xff]
        %v590 = vld [vmem:[%s228 + $0x9a0] sm:$0xff]
        %v591 = vld [vmem:[%s228 + $0x9a8] sm:$0xff]
        %v592 = vld [vmem:[%s228 + $0x9b0] sm:$0xff]
        %v593 = vld [vmem:[%s228 + $0x9b8] sm:$0xff]
        %v594 = vld [vmem:[%s228 + $0x9c0] sm:$0xff]
        %v595 = vld [vmem:[%s228 + $0x9c8] sm:$0xff]
        %v596 = vld [vmem:[%s228 + $0x9d0] sm:$0xff]
        %v597 = vld [vmem:[%s228 + $0x9d8] sm:$0xff]
        %v598 = vld [vmem:[%s228 + $0x9e0] sm:$0xff]
        %v599 = vld [vmem:[%s228 + $0x9e8] sm:$0xff]
        %v600 = vld [vmem:[%s228 + $0x9f0] sm:$0xff]
        %v601 = vld [vmem:[%s228 + $0x9f8] sm:$0xff]
        %v602 = vld [vmem:[%s228 + $0xa00] sm:$0xff]
        %v603 = vld [vmem:[%s228 + $0xa08] sm:$0xff]
        %v604 = vld [vmem:[%s228 + $0xa10] sm:$0xff]
        %v605 = vld [vmem:[%s228 + $0xa18] sm:$0xff]
        %v606 = vld [vmem:[%s228 + $0xa20] sm:$0xff]
        %v607 = vld [vmem:[%s228 + $0xa28] sm:$0xff]
        %v608 = vld [vmem:[%s228 + $0xa30] sm:$0xff]
        %v609 = vld [vmem:[%s228 + $0xa38] sm:$0xff]
        %v610 = vld [vmem:[%s228 + $0xa40] sm:$0xff]
        %v611 = vld [vmem:[%s228 + $0xa48] sm:$0xff]
        %v612 = vld [vmem:[%s228 + $0xa50] sm:$0xff]
        %v613 = vld [vmem:[%s228 + $0xa58] sm:$0xff]
        %v614 = vld [vmem:[%s228 + $0xa60] sm:$0xff]
        %v615 = vld [vmem:[%s228 + $0xa68] sm:$0xff]
        %v616 = vld [vmem:[%s228 + $0xa70] sm:$0xff]
        %v617 = vld [vmem:[%s228 + $0xa78] sm:$0xff]
        %v618 = vld [vmem:[%s228 + $0xa80] sm:$0xff]
        %v619 = vld [vmem:[%s228 + $0xa88] sm:$0xff]
        %v620 = vld [vmem:[%s228 + $0xa90] sm:$0xff]
        %v621 = vld [vmem:[%s228 + $0xa98] sm:$0xff]
        %v622 = vld [vmem:[%s228 + $0xaa0] sm:$0xff]
        %v623 = vld [vmem:[%s228 + $0xaa8] sm:$0xff]
        %v624 = vld [vmem:[%s228 + $0xab0] sm:$0xff]
        %v625 = vld [vmem:[%s228 + $0xab8] sm:$0xff]
        %v626 = vld [vmem:[%s228 + $0xac0] sm:$0xff]
        %v627 = vld [vmem:[%s228 + $0xac8] sm:$0xff]
        %v628 = vld [vmem:[%s228 + $0xad0] sm:$0xff]
        %v629 = vld [vmem:[%s228 + $0xad8] sm:$0xff]
        %v630 = vld [vmem:[%s228 + $0xae0] sm:$0xff]
        %v631 = vld [vmem:[%s228 + $0xae8] sm:$0xff]
        %v632 = vld [vmem:[%s228 + $0xaf0] sm:$0xff]
        %v633 = vld [vmem:[%s228 + $0xaf8] sm:$0xff]
        %v634 = vld [vmem:[%s228 + $0xb00] sm:$0xff]
        %v635 = vld [vmem:[%s228 + $0xb08] sm:$0xff]
        %v636 = vld [vmem:[%s228 + $0xb10] sm:$0xff]
        %v637 = vld [vmem:[%s228 + $0xb18] sm:$0xff]
        %v638 = vld [vmem:[%s228 + $0xb20] sm:$0xff]
        %v639 = vld [vmem:[%s228 + $0xb28] sm:$0xff]
        %v640 = vld [vmem:[%s228 + $0xb30] sm:$0xff]
        %v641 = vld [vmem:[%s228 + $0xb38] sm:$0xff]
        %v642 = vld [vmem:[%s228 + $0xb40] sm:$0xff]
        %v643 = vld [vmem:[%s228 + $0xb48] sm:$0xff]
        %v644 = vld [vmem:[%s228 + $0xb50] sm:$0xff]
        %v645 = vld [vmem:[%s228 + $0xb58] sm:$0xff]
        %v646 = vld [vmem:[%s228 + $0xb60] sm:$0xff]
        %v647 = vld [vmem:[%s228 + $0xb68] sm:$0xff]
        %v648 = vld [vmem:[%s228 + $0xb70] sm:$0xff]
        %v649 = vld [vmem:[%s228 + $0xb78] sm:$0xff]
        %v650 = vld [vmem:[%s228 + $0xb80] sm:$0xff]
        %v651 = vld [vmem:[%s228 + $0xb88] sm:$0xff]
        %v652 = vld [vmem:[%s228 + $0xb90] sm:$0xff]
        %v653 = vld [vmem:[%s228 + $0xb98] sm:$0xff]
        %v654 = vld [vmem:[%s228 + $0xba0] sm:$0xff]
        %v655 = vld [vmem:[%s228 + $0xba8] sm:$0xff]
        %v656 = vld [vmem:[%s228 + $0xbb0] sm:$0xff]
        %v657 = vld [vmem:[%s228 + $0xbb8] sm:$0xff]
        %v658 = vld [vmem:[%s228 + $0xbc0] sm:$0xff]
        %v659 = vld [vmem:[%s228 + $0xbc8] sm:$0xff]
        %v660 = vld [vmem:[%s228 + $0xbd0] sm:$0xff]
        %v661 = vld [vmem:[%s228 + $0xbd8] sm:$0xff]
        %v662 = vld [vmem:[%s228 + $0xbe0] sm:$0xff]
        %v663 = vld [vmem:[%s228 + $0xbe8] sm:$0xff]
        %v664 = vld [vmem:[%s228 + $0xbf0] sm:$0xff]
        %v665 = vld [vmem:[%s228 + $0xbf8] sm:$0xff]
        %v666 = vld [vmem:[%s228 + $0xc00] sm:$0xff]
        %v667 = vld [vmem:[%s228 + $0xc08] sm:$0xff]
        %v668 = vld [vmem:[%s228 + $0xc10] sm:$0xff]
        %v669 = vld [vmem:[%s228 + $0xc18] sm:$0xff]
        %v670 = vld [vmem:[%s228 + $0xc20] sm:$0xff]
        %v671 = vld [vmem:[%s228 + $0xc28] sm:$0xff]
        %v672 = vld [vmem:[%s228 + $0xc30] sm:$0xff]
        %v673 = vld [vmem:[%s228 + $0xc38] sm:$0xff]
        %v674 = vld [vmem:[%s228 + $0xc40] sm:$0xff]
        %v675 = vld [vmem:[%s228 + $0xc48] sm:$0xff]
        %v676 = vld [vmem:[%s228 + $0xc50] sm:$0xff]
        %v677 = vld [vmem:[%s228 + $0xc58] sm:$0xff]
        %v678 = vld [vmem:[%s228 + $0xc60] sm:$0xff]
        %v679 = vld [vmem:[%s228 + $0xc68] sm:$0xff]
        %v680 = vld [vmem:[%s228 + $0xc70] sm:$0xff]
        %v681 = vld [vmem:[%s228 + $0xc78] sm:$0xff]
        %v682 = vld [vmem:[%s228 + $0xc80] sm:$0xff]
        %v683 = vld [vmem:[%s228 + $0xc88] sm:$0xff]
        %v684 = vld [vmem:[%s228 + $0xc90] sm:$0xff]
        %v685 = vld [vmem:[%s228 + $0xc98] sm:$0xff]
        %v686 = vld [vmem:[%s228 + $0xca0] sm:$0xff]
        %v687 = vld [vmem:[%s228 + $0xca8] sm:$0xff]
        %v688 = vld [vmem:[%s228 + $0xcb0] sm:$0xff]
        %v689 = vld [vmem:[%s228 + $0xcb8] sm:$0xff]
        %v690 = vld [vmem:[%s228 + $0xcc0] sm:$0xff]
        %v691 = vld [vmem:[%s228 + $0xcc8] sm:$0xff]
        %v692 = vld [vmem:[%s228 + $0xcd0] sm:$0xff]
        %v693 = vld [vmem:[%s228 + $0xcd8] sm:$0xff]
        %v694 = vld [vmem:[%s228 + $0xce0] sm:$0xff]
        %v695 = vld [vmem:[%s228 + $0xce8] sm:$0xff]
        %v696 = vld [vmem:[%s228 + $0xcf0] sm:$0xff]
        %v697 = vld [vmem:[%s228 + $0xcf8] sm:$0xff]
        %v698 = vld [vmem:[%s228 + $0xd00] sm:$0xff]
        %v699 = vld [vmem:[%s228 + $0xd08] sm:$0xff]
        %v700 = vld [vmem:[%s228 + $0xd10] sm:$0xff]
        %v701 = vld [vmem:[%s228 + $0xd18] sm:$0xff]
        %v702 = vld [vmem:[%s228 + $0xd20] sm:$0xff]
        %v703 = vld [vmem:[%s228 + $0xd28] sm:$0xff]
        %v704 = vld [vmem:[%s228 + $0xd30] sm:$0xff]
        %v705 = vld [vmem:[%s228 + $0xd38] sm:$0xff]
        %v706 = vld [vmem:[%s228 + $0xd40] sm:$0xff]
        %v707 = vld [vmem:[%s228 + $0xd48] sm:$0xff]
        %v708 = vld [vmem:[%s228 + $0xd50] sm:$0xff]
        %v709 = vld [vmem:[%s228 + $0xd58] sm:$0xff]
        %v710 = vld [vmem:[%s228 + $0xd60] sm:$0xff]
        %v711 = vld [vmem:[%s228 + $0xd68] sm:$0xff]
        %v712 = vld [vmem:[%s228 + $0xd70] sm:$0xff]
        %v713 = vld [vmem:[%s228 + $0xd78] sm:$0xff]
        %v714 = vld [vmem:[%s228 + $0xd80] sm:$0xff]
        %v715 = vld [vmem:[%s228 + $0xd88] sm:$0xff]
        %v716 = vld [vmem:[%s228 + $0xd90] sm:$0xff]
        %v717 = vld [vmem:[%s228 + $0xd98] sm:$0xff]
        %v718 = vld [vmem:[%s228 + $0xda0] sm:$0xff]
        %v719 = vld [vmem:[%s228 + $0xda8] sm:$0xff]
        %v720 = vld [vmem:[%s228 + $0xdb0] sm:$0xff]
        %v721 = vld [vmem:[%s228 + $0xdb8] sm:$0xff]
        %v722 = vld [vmem:[%s228 + $0xdc0] sm:$0xff]
        %v723 = vld [vmem:[%s228 + $0xdc8] sm:$0xff]
        %v724 = vld [vmem:[%s228 + $0xdd0] sm:$0xff]
        %v725 = vld [vmem:[%s228 + $0xdd8] sm:$0xff]
        %v726 = vld [vmem:[%s228 + $0xde0] sm:$0xff]
        %v727 = vld [vmem:[%s228 + $0xde8] sm:$0xff]
        %v728 = vld [vmem:[%s228 + $0xdf0] sm:$0xff]
        %v729 = vld [vmem:[%s228 + $0xdf8] sm:$0xff]
        %v730 = vld [vmem:[%s228 + $0xe00] sm:$0xff]
        %v731 = vld [vmem:[%s228 + $0xe08] sm:$0xff]
        %v732 = vld [vmem:[%s228 + $0xe10] sm:$0xff]
        %v733 = vld [vmem:[%s228 + $0xe18] sm:$0xff]
        %v734 = vld [vmem:[%s228 + $0xe20] sm:$0xff]
        %v735 = vld [vmem:[%s228 + $0xe28] sm:$0xff]
        %v736 = vld [vmem:[%s228 + $0xe30] sm:$0xff]
        %v737 = vld [vmem:[%s228 + $0xe38] sm:$0xff]
        %v738 = vld [vmem:[%s228 + $0xe40] sm:$0xff]
        %v739 = vld [vmem:[%s228 + $0xe48] sm:$0xff]
        %v740 = vld [vmem:[%s228 + $0xe50] sm:$0xff]
        %v741 = vld [vmem:[%s228 + $0xe58] sm:$0xff]
        %v742 = vld [vmem:[%s228 + $0xe60] sm:$0xff]
        %v743 = vld [vmem:[%s228 + $0xe68] sm:$0xff]
        %v744 = vld [vmem:[%s228 + $0xe70] sm:$0xff]
        %v745 = vld [vmem:[%s228 + $0xe78] sm:$0xff]
        %v746 = vld [vmem:[%s228 + $0xe80] sm:$0xff]
        %v747 = vld [vmem:[%s228 + $0xe88] sm:$0xff]
        %v748 = vld [vmem:[%s228 + $0xe90] sm:$0xff]
        %v749 = vld [vmem:[%s228 + $0xe98] sm:$0xff]
        %v750 = vld [vmem:[%s228 + $0xea0] sm:$0xff]
        %v751 = vld [vmem:[%s228 + $0xea8] sm:$0xff]
        %v752 = vld [vmem:[%s228 + $0xeb0] sm:$0xff]
        %v753 = vld [vmem:[%s228 + $0xeb8] sm:$0xff]
        %v754 = vld [vmem:[%s228 + $0xec0] sm:$0xff]
        %v755 = vld [vmem:[%s228 + $0xec8] sm:$0xff]
        %v756 = vld [vmem:[%s228 + $0xed0] sm:$0xff]
        %v757 = vld [vmem:[%s228 + $0xed8] sm:$0xff]
        %v758 = vld [vmem:[%s228 + $0xee0] sm:$0xff]
        %v759 = vld [vmem:[%s228 + $0xee8] sm:$0xff]
        %v760 = vld [vmem:[%s228 + $0xef0] sm:$0xff]
        %v761 = vld [vmem:[%s228 + $0xef8] sm:$0xff]
        %v762 = vld [vmem:[%s228 + $0xf00] sm:$0xff]
        %v763 = vld [vmem:[%s228 + $0xf08] sm:$0xff]
        %v764 = vld [vmem:[%s228 + $0xf10] sm:$0xff]
        %v765 = vld [vmem:[%s228 + $0xf18] sm:$0xff]
        %v766 = vld [vmem:[%s228 + $0xf20] sm:$0xff]
        %v767 = vld [vmem:[%s228 + $0xf28] sm:$0xff]
        %v768 = vld [vmem:[%s228 + $0xf30] sm:$0xff]
        %v769 = vld [vmem:[%s228 + $0xf38] sm:$0xff]
        %v770 = vld [vmem:[%s228 + $0xf40] sm:$0xff]
        %v771 = vld [vmem:[%s228 + $0xf48] sm:$0xff]
        %v772 = vld [vmem:[%s228 + $0xf50] sm:$0xff]
        %v773 = vld [vmem:[%s228 + $0xf58] sm:$0xff]
        %v774 = vld [vmem:[%s228 + $0xf60] sm:$0xff]
        %v775 = vld [vmem:[%s228 + $0xf68] sm:$0xff]
        %v776 = vld [vmem:[%s228 + $0xf70] sm:$0xff]
        %v777 = vld [vmem:[%s228 + $0xf78] sm:$0xff]
        %v778 = vld [vmem:[%s228 + $0xf80] sm:$0xff]
        %v779 = vld [vmem:[%s228 + $0xf88] sm:$0xff]
        %v780 = vld [vmem:[%s228 + $0xf90] sm:$0xff]
        %v781 = vld [vmem:[%s228 + $0xf98] sm:$0xff]
        %v782 = vld [vmem:[%s228 + $0xfa0] sm:$0xff]
        %v783 = vld [vmem:[%s228 + $0xfa8] sm:$0xff]
        %v784 = vld [vmem:[%s228 + $0xfb0] sm:$0xff]
        %v785 = vld [vmem:[%s228 + $0xfb8] sm:$0xff]
        %v786 = vld [vmem:[%s228 + $0xfc0] sm:$0xff]
        %v787 = vld [vmem:[%s228 + $0xfc8] sm:$0xff]
        %v788 = vld [vmem:[%s228 + $0xfd0] sm:$0xff]
        %v789 = vld [vmem:[%s228 + $0xfd8] sm:$0xff]
        %v790 = vld [vmem:[%s228 + $0xfe0] sm:$0xff]
        %v791 = vld [vmem:[%s228 + $0xfe8] sm:$0xff]
        %v792 = vld [vmem:[%s228 + $0xff0] sm:$0xff]
        %v793 = vld [vmem:[%s228 + $0xff8] sm:$0xff]
        %v802 = vcombine.high %v274, %v274
        %v803 = vcombine.high %v275, %v275
        %v804 = vcombine.high %v276, %v276
        %v805 = vcombine.high %v277, %v277
        %v806 = vcombine.high %v278, %v278
        %v807 = vcombine.high %v279, %v279
        %v808 = vcombine.high %v280, %v280
        %v809 = vcombine.high %v281, %v281
        %818 = vmatprep.subr.mxu0 %v313
        %819 = vmatpush1.msra.mxu0 %v312
        %820 = vmatprep.subr.mxu0 %v311
        %821 = vmatpush1.msra.mxu0 %v310
        %822 = vmatprep.subr.mxu0 %v309
        %823 = vmatpush1.msra.mxu0 %v308
        %824 = vmatprep.subr.mxu0 %v307
        %825 = vmatpush1.msra.mxu0 %v306
        %826 = vmatprep.subr.mxu0 %v305
        %827 = vmatpush1.msra.mxu0 %v304
        %828 = vmatprep.subr.mxu0 %v303
        %829 = vmatpush1.msra.mxu0 %v302
        %830 = vmatprep.subr.mxu0 %v301
        %831 = vmatpush1.msra.mxu0 %v300
        %832 = vmatprep.subr.mxu0 %v299
        %833 = vmatpush1.msra.mxu0 %v298
        %834 = vmatprep.subr.mxu0 %v297
        %835 = vmatpush1.msra.mxu0 %v296
        %836 = vmatprep.subr.mxu0 %v295
        %837 = vmatpush1.msra.mxu0 %v294
        %838 = vmatprep.subr.mxu0 %v293
        %839 = vmatpush1.msra.mxu0 %v292
        %840 = vmatprep.subr.mxu0 %v291
        %841 = vmatpush1.msra.mxu0 %v290
        %842 = vmatprep.subr.mxu0 %v289
        %843 = vmatpush1.msra.mxu0 %v288
        %844 = vmatprep.subr.mxu0 %v287
        %845 = vmatpush1.msra.mxu0 %v286
        %846 = vmatprep.subr.mxu0 %v285
        %847 = vmatpush1.msra.mxu0 %v284
        %848 = vmatprep.subr.mxu0 %v283
        %849 = vmatpush1.msra.mxu0 %v282
        %850 = vmatprep.subr.mxu0 %v345
        %851 = vmatpush2.msra.mxu0 %v344
        %852 = vmatprep.subr.mxu0 %v343
        %853 = vmatpush2.msra.mxu0 %v342
        %854 = vmatprep.subr.mxu0 %v341
        %855 = vmatpush2.msra.mxu0 %v340
        %856 = vmatprep.subr.mxu0 %v339
        %857 = vmatpush2.msra.mxu0 %v338
        %858 = vmatprep.subr.mxu0 %v337
        %859 = vmatpush2.msra.mxu0 %v336
        %860 = vmatprep.subr.mxu0 %v335
        %861 = vmatpush2.msra.mxu0 %v334
        %862 = vmatprep.subr.mxu0 %v333
        %863 = vmatpush2.msra.mxu0 %v332
        %864 = vmatprep.subr.mxu0 %v331
        %865 = vmatpush2.msra.mxu0 %v330
        %866 = vmatprep.subr.mxu0 %v329
        %867 = vmatpush2.msra.mxu0 %v328
        %868 = vmatprep.subr.mxu0 %v327
        %869 = vmatpush2.msra.mxu0 %v326
        %870 = vmatprep.subr.mxu0 %v325
        %871 = vmatpush2.msra.mxu0 %v324
        %872 = vmatprep.subr.mxu0 %v323
        %873 = vmatpush2.msra.mxu0 %v322
        %874 = vmatprep.subr.mxu0 %v321
        %875 = vmatpush2.msra.mxu0 %v320
        %876 = vmatprep.subr.mxu0 %v319
        %877 = vmatpush2.msra.mxu0 %v318
        %878 = vmatprep.subr.mxu0 %v317
        %879 = vmatpush2.msra.mxu0 %v316
        %880 = vmatprep.subr.mxu0 %v315
        %881 = vmatpush2.msra.mxu0 %v314
        %882 = vmatprep.mubr.f32.mxu0 %v802
        %883 = vmatmul.mubr.f32.gmra.mxu0 %v274
        %v884 = vpop.f32.mrf.mxu0
        %v885 = vadd.f32 0.0, %v884
        %v886 = vpop.f32.mrf.mxu0
        %v887 = vadd.f32 0.0, %v886
        %888 = vdwg.mxu0
        %889 = vmatprep.subr.mxu0 %v377
        %890 = vmatpush1.msra.mxu0 %v376
        %891 = vmatprep.subr.mxu0 %v375
        %892 = vmatpush1.msra.mxu0 %v374
        %893 = vmatprep.subr.mxu0 %v373
        %894 = vmatpush1.msra.mxu0 %v372
        %895 = vmatprep.subr.mxu0 %v371
        %896 = vmatpush1.msra.mxu0 %v370
        %897 = vmatprep.subr.mxu0 %v369
        %898 = vmatpush1.msra.mxu0 %v368
        %899 = vmatprep.subr.mxu0 %v367
        %900 = vmatpush1.msra.mxu0 %v366
        %901 = vmatprep.subr.mxu0 %v365
        %902 = vmatpush1.msra.mxu0 %v364
        %903 = vmatprep.subr.mxu0 %v363
        %904 = vmatpush1.msra.mxu0 %v362
        %905 = vmatprep.subr.mxu0 %v361
        %906 = vmatpush1.msra.mxu0 %v360
        %907 = vmatprep.subr.mxu0 %v359
        %908 = vmatpush1.msra.mxu0 %v358
        %909 = vmatprep.subr.mxu0 %v357
        %910 = vmatpush1.msra.mxu0 %v356
        %911 = vmatprep.subr.mxu0 %v355
        %912 = vmatpush1.msra.mxu0 %v354
        %913 = vmatprep.subr.mxu0 %v353
        %914 = vmatpush1.msra.mxu0 %v352
        %915 = vmatprep.subr.mxu0 %v351
        %916 = vmatpush1.msra.mxu0 %v350
        %917 = vmatprep.subr.mxu0 %v349
        %918 = vmatpush1.msra.mxu0 %v348
        %919 = vmatprep.subr.mxu0 %v347
        %920 = vmatpush1.msra.mxu0 %v346
        %921 = vmatprep.subr.mxu0 %v409
        %922 = vmatpush2.msra.mxu0 %v408
        %923 = vmatprep.subr.mxu0 %v407
        %924 = vmatpush2.msra.mxu0 %v406
        %925 = vmatprep.subr.mxu0 %v405
        %926 = vmatpush2.msra.mxu0 %v404
        %927 = vmatprep.subr.mxu0 %v403
        %928 = vmatpush2.msra.mxu0 %v402
        %929 = vmatprep.subr.mxu0 %v401
        %930 = vmatpush2.msra.mxu0 %v400
        %931 = vmatprep.subr.mxu0 %v399
        %932 = vmatpush2.msra.mxu0 %v398
        %933 = vmatprep.subr.mxu0 %v397
        %934 = vmatpush2.msra.mxu0 %v396
        %935 = vmatprep.subr.mxu0 %v395
        %936 = vmatpush2.msra.mxu0 %v394
        %937 = vmatprep.subr.mxu0 %v393
        %938 = vmatpush2.msra.mxu0 %v392
        %939 = vmatprep.subr.mxu0 %v391
        %940 = vmatpush2.msra.mxu0 %v390
        %941 = vmatprep.subr.mxu0 %v389
        %942 = vmatpush2.msra.mxu0 %v388
        %943 = vmatprep.subr.mxu0 %v387
        %944 = vmatpush2.msra.mxu0 %v386
        %945 = vmatprep.subr.mxu0 %v385
        %946 = vmatpush2.msra.mxu0 %v384
        %947 = vmatprep.subr.mxu0 %v383
        %948 = vmatpush2.msra.mxu0 %v382
        %949 = vmatprep.subr.mxu0 %v381
        %950 = vmatpush2.msra.mxu0 %v380
        %951 = vmatprep.subr.mxu0 %v379
        %952 = vmatpush2.msra.mxu0 %v378
        %953 = vmatprep.mubr.f32.mxu0 %v803
        %954 = vmatmul.mubr.f32.gmra.mxu0 %v275
        %v955 = vpop.f32.mrf.mxu0
        %v956 = vadd.f32 %v885, %v955
        %v957 = vpop.f32.mrf.mxu0
        %v958 = vadd.f32 %v887, %v957
        %959 = vdwg.mxu0
        %960 = vmatprep.subr.mxu0 %v441
        %961 = vmatpush1.msra.mxu0 %v440
        %962 = vmatprep.subr.mxu0 %v439
        %963 = vmatpush1.msra.mxu0 %v438
        %964 = vmatprep.subr.mxu0 %v437
        %965 = vmatpush1.msra.mxu0 %v436
        %966 = vmatprep.subr.mxu0 %v435
        %967 = vmatpush1.msra.mxu0 %v434
        %968 = vmatprep.subr.mxu0 %v433
        %969 = vmatpush1.msra.mxu0 %v432
        %970 = vmatprep.subr.mxu0 %v431
        %971 = vmatpush1.msra.mxu0 %v430
        %972 = vmatprep.subr.mxu0 %v429
        %973 = vmatpush1.msra.mxu0 %v428
        %974 = vmatprep.subr.mxu0 %v427
        %975 = vmatpush1.msra.mxu0 %v426
        %976 = vmatprep.subr.mxu0 %v425
        %977 = vmatpush1.msra.mxu0 %v424
        %978 = vmatprep.subr.mxu0 %v423
        %979 = vmatpush1.msra.mxu0 %v422
        %980 = vmatprep.subr.mxu0 %v421
        %981 = vmatpush1.msra.mxu0 %v420
        %982 = vmatprep.subr.mxu0 %v419
        %983 = vmatpush1.msra.mxu0 %v418
        %984 = vmatprep.subr.mxu0 %v417
        %985 = vmatpush1.msra.mxu0 %v416
        %986 = vmatprep.subr.mxu0 %v415
        %987 = vmatpush1.msra.mxu0 %v414
        %988 = vmatprep.subr.mxu0 %v413
        %989 = vmatpush1.msra.mxu0 %v412
        %990 = vmatprep.subr.mxu0 %v411
        %991 = vmatpush1.msra.mxu0 %v410
        %992 = vmatprep.subr.mxu0 %v473
        %993 = vmatpush2.msra.mxu0 %v472
        %994 = vmatprep.subr.mxu0 %v471
        %995 = vmatpush2.msra.mxu0 %v470
        %996 = vmatprep.subr.mxu0 %v469
        %997 = vmatpush2.msra.mxu0 %v468
        %998 = vmatprep.subr.mxu0 %v467
        %999 = vmatpush2.msra.mxu0 %v466
        %1000 = vmatprep.subr.mxu0 %v465
        %1001 = vmatpush2.msra.mxu0 %v464
        %1002 = vmatprep.subr.mxu0 %v463
        %1003 = vmatpush2.msra.mxu0 %v462
        %1004 = vmatprep.subr.mxu0 %v461
        %1005 = vmatpush2.msra.mxu0 %v460
        %1006 = vmatprep.subr.mxu0 %v459
        %1007 = vmatpush2.msra.mxu0 %v458
        %1008 = vmatprep.subr.mxu0 %v457
        %1009 = vmatpush2.msra.mxu0 %v456
        %1010 = vmatprep.subr.mxu0 %v455
        %1011 = vmatpush2.msra.mxu0 %v454
        %1012 = vmatprep.subr.mxu0 %v453
        %1013 = vmatpush2.msra.mxu0 %v452
        %1014 = vmatprep.subr.mxu0 %v451
        %1015 = vmatpush2.msra.mxu0 %v450
        %1016 = vmatprep.subr.mxu0 %v449
        %1017 = vmatpush2.msra.mxu0 %v448
        %1018 = vmatprep.subr.mxu0 %v447
        %1019 = vmatpush2.msra.mxu0 %v446
        %1020 = vmatprep.subr.mxu0 %v445
        %1021 = vmatpush2.msra.mxu0 %v444
        %1022 = vmatprep.subr.mxu0 %v443
        %1023 = vmatpush2.msra.mxu0 %v442
        %1024 = vmatprep.mubr.f32.mxu0 %v804
        %1025 = vmatmul.mubr.f32.gmra.mxu0 %v276
        %v1026 = vpop.f32.mrf.mxu0
        %v1027 = vadd.f32 %v956, %v1026
        %v1028 = vpop.f32.mrf.mxu0
        %v1029 = vadd.f32 %v958, %v1028
        %1030 = vdwg.mxu0
        %1031 = vmatprep.subr.mxu0 %v505
        %1032 = vmatpush1.msra.mxu0 %v504
        %1033 = vmatprep.subr.mxu0 %v503
        %1034 = vmatpush1.msra.mxu0 %v502
        %1035 = vmatprep.subr.mxu0 %v501
        %1036 = vmatpush1.msra.mxu0 %v500
        %1037 = vmatprep.subr.mxu0 %v499
        %1038 = vmatpush1.msra.mxu0 %v498
        %1039 = vmatprep.subr.mxu0 %v497
        %1040 = vmatpush1.msra.mxu0 %v496
        %1041 = vmatprep.subr.mxu0 %v495
        %1042 = vmatpush1.msra.mxu0 %v494
        %1043 = vmatprep.subr.mxu0 %v493
        %1044 = vmatpush1.msra.mxu0 %v492
        %1045 = vmatprep.subr.mxu0 %v491
        %1046 = vmatpush1.msra.mxu0 %v490
        %1047 = vmatprep.subr.mxu0 %v489
        %1048 = vmatpush1.msra.mxu0 %v488
        %1049 = vmatprep.subr.mxu0 %v487
        %1050 = vmatpush1.msra.mxu0 %v486
        %1051 = vmatprep.subr.mxu0 %v485
        %1052 = vmatpush1.msra.mxu0 %v484
        %1053 = vmatprep.subr.mxu0 %v483
        %1054 = vmatpush1.msra.mxu0 %v482
        %1055 = vmatprep.subr.mxu0 %v481
        %1056 = vmatpush1.msra.mxu0 %v480
        %1057 = vmatprep.subr.mxu0 %v479
        %1058 = vmatpush1.msra.mxu0 %v478
        %1059 = vmatprep.subr.mxu0 %v477
        %1060 = vmatpush1.msra.mxu0 %v476
        %1061 = vmatprep.subr.mxu0 %v475
        %1062 = vmatpush1.msra.mxu0 %v474
        %1063 = vmatprep.subr.mxu0 %v537
        %1064 = vmatpush2.msra.mxu0 %v536
        %1065 = vmatprep.subr.mxu0 %v535
        %1066 = vmatpush2.msra.mxu0 %v534
        %1067 = vmatprep.subr.mxu0 %v533
        %1068 = vmatpush2.msra.mxu0 %v532
        %1069 = vmatprep.subr.mxu0 %v531
        %1070 = vmatpush2.msra.mxu0 %v530
        %1071 = vmatprep.subr.mxu0 %v529
        %1072 = vmatpush2.msra.mxu0 %v528
        %1073 = vmatprep.subr.mxu0 %v527
        %1074 = vmatpush2.msra.mxu0 %v526
        %1075 = vmatprep.subr.mxu0 %v525
        %1076 = vmatpush2.msra.mxu0 %v524
        %1077 = vmatprep.subr.mxu0 %v523
        %1078 = vmatpush2.msra.mxu0 %v522
        %1079 = vmatprep.subr.mxu0 %v521
        %1080 = vmatpush2.msra.mxu0 %v520
        %1081 = vmatprep.subr.mxu0 %v519
        %1082 = vmatpush2.msra.mxu0 %v518
        %1083 = vmatprep.subr.mxu0 %v517
        %1084 = vmatpush2.msra.mxu0 %v516
        %1085 = vmatprep.subr.mxu0 %v515
        %1086 = vmatpush2.msra.mxu0 %v514
        %1087 = vmatprep.subr.mxu0 %v513
        %1088 = vmatpush2.msra.mxu0 %v512
        %1089 = vmatprep.subr.mxu0 %v511
        %1090 = vmatpush2.msra.mxu0 %v510
        %1091 = vmatprep.subr.mxu0 %v509
        %1092 = vmatpush2.msra.mxu0 %v508
        %1093 = vmatprep.subr.mxu0 %v507
        %1094 = vmatpush2.msra.mxu0 %v506
        %1095 = vmatprep.mubr.f32.mxu0 %v805
        %1096 = vmatmul.mubr.f32.gmra.mxu0 %v277
        %v1097 = vpop.f32.mrf.mxu0
        %v1098 = vadd.f32 %v1027, %v1097
        %v1099 = vpop.f32.mrf.mxu0
        %v1100 = vadd.f32 %v1029, %v1099
        %1101 = vdwg.mxu0
        %1102 = vmatprep.subr.mxu0 %v569
        %1103 = vmatpush1.msra.mxu0 %v568
        %1104 = vmatprep.subr.mxu0 %v567
        %1105 = vmatpush1.msra.mxu0 %v566
        %1106 = vmatprep.subr.mxu0 %v565
        %1107 = vmatpush1.msra.mxu0 %v564
        %1108 = vmatprep.subr.mxu0 %v563
        %1109 = vmatpush1.msra.mxu0 %v562
        %1110 = vmatprep.subr.mxu0 %v561
        %1111 = vmatpush1.msra.mxu0 %v560
        %1112 = vmatprep.subr.mxu0 %v559
        %1113 = vmatpush1.msra.mxu0 %v558
        %1114 = vmatprep.subr.mxu0 %v557
        %1115 = vmatpush1.msra.mxu0 %v556
        %1116 = vmatprep.subr.mxu0 %v555
        %1117 = vmatpush1.msra.mxu0 %v554
        %1118 = vmatprep.subr.mxu0 %v553
        %1119 = vmatpush1.msra.mxu0 %v552
        %1120 = vmatprep.subr.mxu0 %v551
        %1121 = vmatpush1.msra.mxu0 %v550
        %1122 = vmatprep.subr.mxu0 %v549
        %1123 = vmatpush1.msra.mxu0 %v548
        %1124 = vmatprep.subr.mxu0 %v547
        %1125 = vmatpush1.msra.mxu0 %v546
        %1126 = vmatprep.subr.mxu0 %v545
        %1127 = vmatpush1.msra.mxu0 %v544
        %1128 = vmatprep.subr.mxu0 %v543
        %1129 = vmatpush1.msra.mxu0 %v542
        %1130 = vmatprep.subr.mxu0 %v541
        %1131 = vmatpush1.msra.mxu0 %v540
        %1132 = vmatprep.subr.mxu0 %v539
        %1133 = vmatpush1.msra.mxu0 %v538
        %1134 = vmatprep.subr.mxu0 %v601
        %1135 = vmatpush2.msra.mxu0 %v600
        %1136 = vmatprep.subr.mxu0 %v599
        %1137 = vmatpush2.msra.mxu0 %v598
        %1138 = vmatprep.subr.mxu0 %v597
        %1139 = vmatpush2.msra.mxu0 %v596
        %1140 = vmatprep.subr.mxu0 %v595
        %1141 = vmatpush2.msra.mxu0 %v594
        %1142 = vmatprep.subr.mxu0 %v593
        %1143 = vmatpush2.msra.mxu0 %v592
        %1144 = vmatprep.subr.mxu0 %v591
        %1145 = vmatpush2.msra.mxu0 %v590
        %1146 = vmatprep.subr.mxu0 %v589
        %1147 = vmatpush2.msra.mxu0 %v588
        %1148 = vmatprep.subr.mxu0 %v587
        %1149 = vmatpush2.msra.mxu0 %v586
        %1150 = vmatprep.subr.mxu0 %v585
        %1151 = vmatpush2.msra.mxu0 %v584
        %1152 = vmatprep.subr.mxu0 %v583
        %1153 = vmatpush2.msra.mxu0 %v582
        %1154 = vmatprep.subr.mxu0 %v581
        %1155 = vmatpush2.msra.mxu0 %v580
        %1156 = vmatprep.subr.mxu0 %v579
        %1157 = vmatpush2.msra.mxu0 %v578
        %1158 = vmatprep.subr.mxu0 %v577
        %1159 = vmatpush2.msra.mxu0 %v576
        %1160 = vmatprep.subr.mxu0 %v575
        %1161 = vmatpush2.msra.mxu0 %v574
        %1162 = vmatprep.subr.mxu0 %v573
        %1163 = vmatpush2.msra.mxu0 %v572
        %1164 = vmatprep.subr.mxu0 %v571
        %1165 = vmatpush2.msra.mxu0 %v570
        %1166 = vmatprep.mubr.f32.mxu0 %v806
        %1167 = vmatmul.mubr.f32.gmra.mxu0 %v278
        %v1168 = vpop.f32.mrf.mxu0
        %v1169 = vadd.f32 %v1098, %v1168
        %v1170 = vpop.f32.mrf.mxu0
        %v1171 = vadd.f32 %v1100, %v1170
        %1172 = vdwg.mxu0
        %1173 = vmatprep.subr.mxu0 %v633
        %1174 = vmatpush1.msra.mxu0 %v632
        %1175 = vmatprep.subr.mxu0 %v631
        %1176 = vmatpush1.msra.mxu0 %v630
        %1177 = vmatprep.subr.mxu0 %v629
        %1178 = vmatpush1.msra.mxu0 %v628
        %1179 = vmatprep.subr.mxu0 %v627
        %1180 = vmatpush1.msra.mxu0 %v626
        %1181 = vmatprep.subr.mxu0 %v625
        %1182 = vmatpush1.msra.mxu0 %v624
        %1183 = vmatprep.subr.mxu0 %v623
        %1184 = vmatpush1.msra.mxu0 %v622
        %1185 = vmatprep.subr.mxu0 %v621
        %1186 = vmatpush1.msra.mxu0 %v620
        %1187 = vmatprep.subr.mxu0 %v619
        %1188 = vmatpush1.msra.mxu0 %v618
        %1189 = vmatprep.subr.mxu0 %v617
        %1190 = vmatpush1.msra.mxu0 %v616
        %1191 = vmatprep.subr.mxu0 %v615
        %1192 = vmatpush1.msra.mxu0 %v614
        %1193 = vmatprep.subr.mxu0 %v613
        %1194 = vmatpush1.msra.mxu0 %v612
        %1195 = vmatprep.subr.mxu0 %v611
        %1196 = vmatpush1.msra.mxu0 %v610
        %1197 = vmatprep.subr.mxu0 %v609
        %1198 = vmatpush1.msra.mxu0 %v608
        %1199 = vmatprep.subr.mxu0 %v607
        %1200 = vmatpush1.msra.mxu0 %v606
        %1201 = vmatprep.subr.mxu0 %v605
        %1202 = vmatpush1.msra.mxu0 %v604
        %1203 = vmatprep.subr.mxu0 %v603
        %1204 = vmatpush1.msra.mxu0 %v602
        %1205 = vmatprep.subr.mxu0 %v665
        %1206 = vmatpush2.msra.mxu0 %v664
        %1207 = vmatprep.subr.mxu0 %v663
        %1208 = vmatpush2.msra.mxu0 %v662
        %1209 = vmatprep.subr.mxu0 %v661
        %1210 = vmatpush2.msra.mxu0 %v660
        %1211 = vmatprep.subr.mxu0 %v659
        %1212 = vmatpush2.msra.mxu0 %v658
        %1213 = vmatprep.subr.mxu0 %v657
        %1214 = vmatpush2.msra.mxu0 %v656
        %1215 = vmatprep.subr.mxu0 %v655
        %1216 = vmatpush2.msra.mxu0 %v654
        %1217 = vmatprep.subr.mxu0 %v653
        %1218 = vmatpush2.msra.mxu0 %v652
        %1219 = vmatprep.subr.mxu0 %v651
        %1220 = vmatpush2.msra.mxu0 %v650
        %1221 = vmatprep.subr.mxu0 %v649
        %1222 = vmatpush2.msra.mxu0 %v648
        %1223 = vmatprep.subr.mxu0 %v647
        %1224 = vmatpush2.msra.mxu0 %v646
        %1225 = vmatprep.subr.mxu0 %v645
        %1226 = vmatpush2.msra.mxu0 %v644
        %1227 = vmatprep.subr.mxu0 %v643
        %1228 = vmatpush2.msra.mxu0 %v642
        %1229 = vmatprep.subr.mxu0 %v641
        %1230 = vmatpush2.msra.mxu0 %v640
        %1231 = vmatprep.subr.mxu0 %v639
        %1232 = vmatpush2.msra.mxu0 %v638
        %1233 = vmatprep.subr.mxu0 %v637
        %1234 = vmatpush2.msra.mxu0 %v636
        %1235 = vmatprep.subr.mxu0 %v635
        %1236 = vmatpush2.msra.mxu0 %v634
        %1237 = vmatprep.mubr.f32.mxu0 %v807
        %1238 = vmatmul.mubr.f32.gmra.mxu0 %v279
        %v1239 = vpop.f32.mrf.mxu0
        %v1240 = vadd.f32 %v1169, %v1239
        %v1241 = vpop.f32.mrf.mxu0
        %v1242 = vadd.f32 %v1171, %v1241
        %1243 = vdwg.mxu0
        %1244 = vmatprep.subr.mxu0 %v697
        %1245 = vmatpush1.msra.mxu0 %v696
        %1246 = vmatprep.subr.mxu0 %v695
        %1247 = vmatpush1.msra.mxu0 %v694
        %1248 = vmatprep.subr.mxu0 %v693
        %1249 = vmatpush1.msra.mxu0 %v692
        %1250 = vmatprep.subr.mxu0 %v691
        %1251 = vmatpush1.msra.mxu0 %v690
        %1252 = vmatprep.subr.mxu0 %v689
        %1253 = vmatpush1.msra.mxu0 %v688
        %1254 = vmatprep.subr.mxu0 %v687
        %1255 = vmatpush1.msra.mxu0 %v686
        %1256 = vmatprep.subr.mxu0 %v685
        %1257 = vmatpush1.msra.mxu0 %v684
        %1258 = vmatprep.subr.mxu0 %v683
        %1259 = vmatpush1.msra.mxu0 %v682
        %1260 = vmatprep.subr.mxu0 %v681
        %1261 = vmatpush1.msra.mxu0 %v680
        %1262 = vmatprep.subr.mxu0 %v679
        %1263 = vmatpush1.msra.mxu0 %v678
        %1264 = vmatprep.subr.mxu0 %v677
        %1265 = vmatpush1.msra.mxu0 %v676
        %1266 = vmatprep.subr.mxu0 %v675
        %1267 = vmatpush1.msra.mxu0 %v674
        %1268 = vmatprep.subr.mxu0 %v673
        %1269 = vmatpush1.msra.mxu0 %v672
        %1270 = vmatprep.subr.mxu0 %v671
        %1271 = vmatpush1.msra.mxu0 %v670
        %1272 = vmatprep.subr.mxu0 %v669
        %1273 = vmatpush1.msra.mxu0 %v668
        %1274 = vmatprep.subr.mxu0 %v667
        %1275 = vmatpush1.msra.mxu0 %v666
        %1276 = vmatprep.subr.mxu0 %v729
        %1277 = vmatpush2.msra.mxu0 %v728
        %1278 = vmatprep.subr.mxu0 %v727
        %1279 = vmatpush2.msra.mxu0 %v726
        %1280 = vmatprep.subr.mxu0 %v725
        %1281 = vmatpush2.msra.mxu0 %v724
        %1282 = vmatprep.subr.mxu0 %v723
        %1283 = vmatpush2.msra.mxu0 %v722
        %1284 = vmatprep.subr.mxu0 %v721
        %1285 = vmatpush2.msra.mxu0 %v720
        %1286 = vmatprep.subr.mxu0 %v719
        %1287 = vmatpush2.msra.mxu0 %v718
        %1288 = vmatprep.subr.mxu0 %v717
        %1289 = vmatpush2.msra.mxu0 %v716
        %1290 = vmatprep.subr.mxu0 %v715
        %1291 = vmatpush2.msra.mxu0 %v714
        %1292 = vmatprep.subr.mxu0 %v713
        %1293 = vmatpush2.msra.mxu0 %v712
        %1294 = vmatprep.subr.mxu0 %v711
        %1295 = vmatpush2.msra.mxu0 %v710
        %1296 = vmatprep.subr.mxu0 %v709
        %1297 = vmatpush2.msra.mxu0 %v708
        %1298 = vmatprep.subr.mxu0 %v707
        %1299 = vmatpush2.msra.mxu0 %v706
        %1300 = vmatprep.subr.mxu0 %v705
        %1301 = vmatpush2.msra.mxu0 %v704
        %1302 = vmatprep.subr.mxu0 %v703
        %1303 = vmatpush2.msra.mxu0 %v702
        %1304 = vmatprep.subr.mxu0 %v701
        %1305 = vmatpush2.msra.mxu0 %v700
        %1306 = vmatprep.subr.mxu0 %v699
        %1307 = vmatpush2.msra.mxu0 %v698
        %1308 = vmatprep.mubr.f32.mxu0 %v808
        %1309 = vmatmul.mubr.f32.gmra.mxu0 %v280
        %v1310 = vpop.f32.mrf.mxu0
        %v1311 = vadd.f32 %v1240, %v1310
        %v1312 = vpop.f32.mrf.mxu0
        %v1313 = vadd.f32 %v1242, %v1312
        %1314 = vdwg.mxu0
        %1315 = vmatprep.subr.mxu0 %v761
        %1316 = vmatpush1.msra.mxu0 %v760
        %1317 = vmatprep.subr.mxu0 %v759
        %1318 = vmatpush1.msra.mxu0 %v758
        %1319 = vmatprep.subr.mxu0 %v757
        %1320 = vmatpush1.msra.mxu0 %v756
        %1321 = vmatprep.subr.mxu0 %v755
        %1322 = vmatpush1.msra.mxu0 %v754
        %1323 = vmatprep.subr.mxu0 %v753
        %1324 = vmatpush1.msra.mxu0 %v752
        %1325 = vmatprep.subr.mxu0 %v751
        %1326 = vmatpush1.msra.mxu0 %v750
        %1327 = vmatprep.subr.mxu0 %v749
        %1328 = vmatpush1.msra.mxu0 %v748
        %1329 = vmatprep.subr.mxu0 %v747
        %1330 = vmatpush1.msra.mxu0 %v746
        %1331 = vmatprep.subr.mxu0 %v745
        %1332 = vmatpush1.msra.mxu0 %v744
        %1333 = vmatprep.subr.mxu0 %v743
        %1334 = vmatpush1.msra.mxu0 %v742
        %1335 = vmatprep.subr.mxu0 %v741
        %1336 = vmatpush1.msra.mxu0 %v740
        %1337 = vmatprep.subr.mxu0 %v739
        %1338 = vmatpush1.msra.mxu0 %v738
        %1339 = vmatprep.subr.mxu0 %v737
        %1340 = vmatpush1.msra.mxu0 %v736
        %1341 = vmatprep.subr.mxu0 %v735
        %1342 = vmatpush1.msra.mxu0 %v734
        %1343 = vmatprep.subr.mxu0 %v733
        %1344 = vmatpush1.msra.mxu0 %v732
        %1345 = vmatprep.subr.mxu0 %v731
        %1346 = vmatpush1.msra.mxu0 %v730
        %1347 = vmatprep.subr.mxu0 %v793
        %1348 = vmatpush2.msra.mxu0 %v792
        %1349 = vmatprep.subr.mxu0 %v791
        %1350 = vmatpush2.msra.mxu0 %v790
        %1351 = vmatprep.subr.mxu0 %v789
        %1352 = vmatpush2.msra.mxu0 %v788
        %1353 = vmatprep.subr.mxu0 %v787
        %1354 = vmatpush2.msra.mxu0 %v786
        %1355 = vmatprep.subr.mxu0 %v785
        %1356 = vmatpush2.msra.mxu0 %v784
        %1357 = vmatprep.subr.mxu0 %v783
        %1358 = vmatpush2.msra.mxu0 %v782
        %1359 = vmatprep.subr.mxu0 %v781
        %1360 = vmatpush2.msra.mxu0 %v780
        %1361 = vmatprep.subr.mxu0 %v779
        %1362 = vmatpush2.msra.mxu0 %v778
        %1363 = vmatprep.subr.mxu0 %v777
        %1364 = vmatpush2.msra.mxu0 %v776
        %1365 = vmatprep.subr.mxu0 %v775
        %1366 = vmatpush2.msra.mxu0 %v774
        %1367 = vmatprep.subr.mxu0 %v773
        %1368 = vmatpush2.msra.mxu0 %v772
        %1369 = vmatprep.subr.mxu0 %v771
        %1370 = vmatpush2.msra.mxu0 %v770
        %1371 = vmatprep.subr.mxu0 %v769
        %1372 = vmatpush2.msra.mxu0 %v768
        %1373 = vmatprep.subr.mxu0 %v767
        %1374 = vmatpush2.msra.mxu0 %v766
        %1375 = vmatprep.subr.mxu0 %v765
        %1376 = vmatpush2.msra.mxu0 %v764
        %1377 = vmatprep.subr.mxu0 %v763
        %1378 = vmatpush2.msra.mxu0 %v762
        %1379 = vmatprep.mubr.f32.mxu0 %v809
        %1380 = vmatmul.mubr.f32.gmra.mxu0 %v281
        %v1381 = vpop.f32.mrf.mxu0
        %v1382 = vadd.f32 %v1311, %v1381
        %v1383 = vpop.f32.mrf.mxu0
        %v1384 = vadd.f32 %v1313, %v1383
        %1385 = vdwg.mxu0
        %v1386 = vld [vmem:[%s266] sm:$0xff]
        %v1387 = vld [vmem:[%s266 + $0x8] sm:$0xff]
        %v1388 = vld [vmem:[%s266 + $0x10] sm:$0xff]
        %v1389 = vld [vmem:[%s266 + $0x18] sm:$0xff]
        %v1390 = vld [vmem:[%s266 + $0x20] sm:$0xff]
        %v1391 = vld [vmem:[%s266 + $0x28] sm:$0xff]
        %v1392 = vld [vmem:[%s266 + $0x30] sm:$0xff]
        %v1393 = vld [vmem:[%s266 + $0x38] sm:$0xff]
        %v1394 = vld [vmem:[%s266 + $0x40] sm:$0xff]
        %v1395 = vld [vmem:[%s266 + $0x48] sm:$0xff]
        %v1396 = vld [vmem:[%s266 + $0x50] sm:$0xff]
        %v1397 = vld [vmem:[%s266 + $0x58] sm:$0xff]
        %v1398 = vld [vmem:[%s266 + $0x60] sm:$0xff]
        %v1399 = vld [vmem:[%s266 + $0x68] sm:$0xff]
        %v1400 = vld [vmem:[%s266 + $0x70] sm:$0xff]
        %v1401 = vld [vmem:[%s266 + $0x78] sm:$0xff]
        %v1402 = vld [vmem:[%s266 + $0x80] sm:$0xff]
        %v1403 = vld [vmem:[%s266 + $0x88] sm:$0xff]
        %v1404 = vld [vmem:[%s266 + $0x90] sm:$0xff]
        %v1405 = vld [vmem:[%s266 + $0x98] sm:$0xff]
        %v1406 = vld [vmem:[%s266 + $0xa0] sm:$0xff]
        %v1407 = vld [vmem:[%s266 + $0xa8] sm:$0xff]
        %v1408 = vld [vmem:[%s266 + $0xb0] sm:$0xff]
        %v1409 = vld [vmem:[%s266 + $0xb8] sm:$0xff]
        %v1410 = vld [vmem:[%s266 + $0xc0] sm:$0xff]
        %v1411 = vld [vmem:[%s266 + $0xc8] sm:$0xff]
        %v1412 = vld [vmem:[%s266 + $0xd0] sm:$0xff]
        %v1413 = vld [vmem:[%s266 + $0xd8] sm:$0xff]
        %v1414 = vld [vmem:[%s266 + $0xe0] sm:$0xff]
        %v1415 = vld [vmem:[%s266 + $0xe8] sm:$0xff]
        %v1416 = vld [vmem:[%s266 + $0xf0] sm:$0xff]
        %v1417 = vld [vmem:[%s266 + $0xf8] sm:$0xff]
        %s1418 = scalar_lea.vmem %s266, 256
        %v1419 = vld [vmem:[%s1418] sm:$0xff]
        %v1420 = vld [vmem:[%s1418 + $0x8] sm:$0xff]
        %v1421 = vld [vmem:[%s1418 + $0x10] sm:$0xff]
        %v1422 = vld [vmem:[%s1418 + $0x18] sm:$0xff]
        %v1423 = vld [vmem:[%s1418 + $0x20] sm:$0xff]
        %v1424 = vld [vmem:[%s1418 + $0x28] sm:$0xff]
        %v1425 = vld [vmem:[%s1418 + $0x30] sm:$0xff]
        %v1426 = vld [vmem:[%s1418 + $0x38] sm:$0xff]
        %v1427 = vld [vmem:[%s1418 + $0x40] sm:$0xff]
        %v1428 = vld [vmem:[%s1418 + $0x48] sm:$0xff]
        %v1429 = vld [vmem:[%s1418 + $0x50] sm:$0xff]
        %v1430 = vld [vmem:[%s1418 + $0x58] sm:$0xff]
        %v1431 = vld [vmem:[%s1418 + $0x60] sm:$0xff]
        %v1432 = vld [vmem:[%s1418 + $0x68] sm:$0xff]
        %v1433 = vld [vmem:[%s1418 + $0x70] sm:$0xff]
        %v1434 = vld [vmem:[%s1418 + $0x78] sm:$0xff]
        %v1435 = vld [vmem:[%s1418 + $0x80] sm:$0xff]
        %v1436 = vld [vmem:[%s1418 + $0x88] sm:$0xff]
        %v1437 = vld [vmem:[%s1418 + $0x90] sm:$0xff]
        %v1438 = vld [vmem:[%s1418 + $0x98] sm:$0xff]
        %v1439 = vld [vmem:[%s1418 + $0xa0] sm:$0xff]
        %v1440 = vld [vmem:[%s1418 + $0xa8] sm:$0xff]
        %v1441 = vld [vmem:[%s1418 + $0xb0] sm:$0xff]
        %v1442 = vld [vmem:[%s1418 + $0xb8] sm:$0xff]
        %v1443 = vld [vmem:[%s1418 + $0xc0] sm:$0xff]
        %v1444 = vld [vmem:[%s1418 + $0xc8] sm:$0xff]
        %v1445 = vld [vmem:[%s1418 + $0xd0] sm:$0xff]
        %v1446 = vld [vmem:[%s1418 + $0xd8] sm:$0xff]
        %v1447 = vld [vmem:[%s1418 + $0xe0] sm:$0xff]
        %v1448 = vld [vmem:[%s1418 + $0xe8] sm:$0xff]
        %v1449 = vld [vmem:[%s1418 + $0xf0] sm:$0xff]
        %v1450 = vld [vmem:[%s1418 + $0xf8] sm:$0xff]
        %v1453 = vrot.slane %v1382, 1
        %v1454 = vrot.slane %v1384, 1
        %1457 = vmatprep.subr.mxu0 0.0
        %1458 = vmatpush1.msra.mxu0 %v1434
        %1459 = vmatprep.subr.mxu0 0.0
        %1460 = vmatpush1.msra.mxu0 %v1433
        %1461 = vmatprep.subr.mxu0 0.0
        %1462 = vmatpush1.msra.mxu0 %v1432
        %1463 = vmatprep.subr.mxu0 0.0
        %1464 = vmatpush1.msra.mxu0 %v1431
        %1465 = vmatprep.subr.mxu0 0.0
        %1466 = vmatpush1.msra.mxu0 %v1430
        %1467 = vmatprep.subr.mxu0 0.0
        %1468 = vmatpush1.msra.mxu0 %v1429
        %1469 = vmatprep.subr.mxu0 0.0
        %1470 = vmatpush1.msra.mxu0 %v1428
        %1471 = vmatprep.subr.mxu0 0.0
        %1472 = vmatpush1.msra.mxu0 %v1427
        %1473 = vmatprep.subr.mxu0 0.0
        %1474 = vmatpush1.msra.mxu0 %v1426
        %1475 = vmatprep.subr.mxu0 0.0
        %1476 = vmatpush1.msra.mxu0 %v1425
        %1477 = vmatprep.subr.mxu0 0.0
        %1478 = vmatpush1.msra.mxu0 %v1424
        %1479 = vmatprep.subr.mxu0 0.0
        %1480 = vmatpush1.msra.mxu0 %v1423
        %1481 = vmatprep.subr.mxu0 0.0
        %1482 = vmatpush1.msra.mxu0 %v1422
        %1483 = vmatprep.subr.mxu0 0.0
        %1484 = vmatpush1.msra.mxu0 %v1421
        %1485 = vmatprep.subr.mxu0 0.0
        %1486 = vmatpush1.msra.mxu0 %v1420
        %1487 = vmatprep.subr.mxu0 0.0
        %1488 = vmatpush1.msra.mxu0 %v1419
        %1489 = vmatprep.subr.mxu0 0.0
        %1490 = vmatpush2.msra.mxu0 %v1450
        %1491 = vmatprep.subr.mxu0 0.0
        %1492 = vmatpush2.msra.mxu0 %v1449
        %1493 = vmatprep.subr.mxu0 0.0
        %1494 = vmatpush2.msra.mxu0 %v1448
        %1495 = vmatprep.subr.mxu0 0.0
        %1496 = vmatpush2.msra.mxu0 %v1447
        %1497 = vmatprep.subr.mxu0 0.0
        %1498 = vmatpush2.msra.mxu0 %v1446
        %1499 = vmatprep.subr.mxu0 0.0
        %1500 = vmatpush2.msra.mxu0 %v1445
        %1501 = vmatprep.subr.mxu0 0.0
        %1502 = vmatpush2.msra.mxu0 %v1444
        %1503 = vmatprep.subr.mxu0 0.0
        %1504 = vmatpush2.msra.mxu0 %v1443
        %1505 = vmatprep.subr.mxu0 0.0
        %1506 = vmatpush2.msra.mxu0 %v1442
        %1507 = vmatprep.subr.mxu0 0.0
        %1508 = vmatpush2.msra.mxu0 %v1441
        %1509 = vmatprep.subr.mxu0 0.0
        %1510 = vmatpush2.msra.mxu0 %v1440
        %1511 = vmatprep.subr.mxu0 0.0
        %1512 = vmatpush2.msra.mxu0 %v1439
        %1513 = vmatprep.subr.mxu0 0.0
        %1514 = vmatpush2.msra.mxu0 %v1438
        %1515 = vmatprep.subr.mxu0 0.0
        %1516 = vmatpush2.msra.mxu0 %v1437
        %1517 = vmatprep.subr.mxu0 0.0
        %1518 = vmatpush2.msra.mxu0 %v1436
        %1519 = vmatprep.subr.mxu0 0.0
        %1520 = vmatpush2.msra.mxu0 %v1435
        %1521 = vmatprep.mubr.f32.mxu0 %v1454
        %1522 = vmatmul.mubr.f32.gmra.mxu0 %v1453
        %v1523 = vpop.f32.mrf.mxu0
        %v1524 = vadd.f32 0.0, %v1523
        %v1525 = vpop.f32.mrf.mxu0
        %1526 = vdwg.mxu0
        %1527 = vmatprep.subr.mxu0 0.0
        %1528 = vmatpush1.msra.mxu0 %v1401
        %1529 = vmatprep.subr.mxu0 0.0
        %1530 = vmatpush1.msra.mxu0 %v1400
        %1531 = vmatprep.subr.mxu0 0.0
        %1532 = vmatpush1.msra.mxu0 %v1399
        %1533 = vmatprep.subr.mxu0 0.0
        %1534 = vmatpush1.msra.mxu0 %v1398
        %1535 = vmatprep.subr.mxu0 0.0
        %1536 = vmatpush1.msra.mxu0 %v1397
        %1537 = vmatprep.subr.mxu0 0.0
        %1538 = vmatpush1.msra.mxu0 %v1396
        %1539 = vmatprep.subr.mxu0 0.0
        %1540 = vmatpush1.msra.mxu0 %v1395
        %1541 = vmatprep.subr.mxu0 0.0
        %1542 = vmatpush1.msra.mxu0 %v1394
        %1543 = vmatprep.subr.mxu0 0.0
        %1544 = vmatpush1.msra.mxu0 %v1393
        %1545 = vmatprep.subr.mxu0 0.0
        %1546 = vmatpush1.msra.mxu0 %v1392
        %1547 = vmatprep.subr.mxu0 0.0
        %1548 = vmatpush1.msra.mxu0 %v1391
        %1549 = vmatprep.subr.mxu0 0.0
        %1550 = vmatpush1.msra.mxu0 %v1390
        %1551 = vmatprep.subr.mxu0 0.0
        %1552 = vmatpush1.msra.mxu0 %v1389
        %1553 = vmatprep.subr.mxu0 0.0
        %1554 = vmatpush1.msra.mxu0 %v1388
        %1555 = vmatprep.subr.mxu0 0.0
        %1556 = vmatpush1.msra.mxu0 %v1387
        %1557 = vmatprep.subr.mxu0 0.0
        %1558 = vmatpush1.msra.mxu0 %v1386
        %1559 = vmatprep.subr.mxu0 0.0
        %1560 = vmatpush2.msra.mxu0 %v1417
        %1561 = vmatprep.subr.mxu0 0.0
        %1562 = vmatpush2.msra.mxu0 %v1416
        %1563 = vmatprep.subr.mxu0 0.0
        %1564 = vmatpush2.msra.mxu0 %v1415
        %1565 = vmatprep.subr.mxu0 0.0
        %1566 = vmatpush2.msra.mxu0 %v1414
        %1567 = vmatprep.subr.mxu0 0.0
        %1568 = vmatpush2.msra.mxu0 %v1413
        %1569 = vmatprep.subr.mxu0 0.0
        %1570 = vmatpush2.msra.mxu0 %v1412
        %1571 = vmatprep.subr.mxu0 0.0
        %1572 = vmatpush2.msra.mxu0 %v1411
        %1573 = vmatprep.subr.mxu0 0.0
        %1574 = vmatpush2.msra.mxu0 %v1410
        %1575 = vmatprep.subr.mxu0 0.0
        %1576 = vmatpush2.msra.mxu0 %v1409
        %1577 = vmatprep.subr.mxu0 0.0
        %1578 = vmatpush2.msra.mxu0 %v1408
        %1579 = vmatprep.subr.mxu0 0.0
        %1580 = vmatpush2.msra.mxu0 %v1407
        %1581 = vmatprep.subr.mxu0 0.0
        %1582 = vmatpush2.msra.mxu0 %v1406
        %1583 = vmatprep.subr.mxu0 0.0
        %1584 = vmatpush2.msra.mxu0 %v1405
        %1585 = vmatprep.subr.mxu0 0.0
        %1586 = vmatpush2.msra.mxu0 %v1404
        %1587 = vmatprep.subr.mxu0 0.0
        %1588 = vmatpush2.msra.mxu0 %v1403
        %1589 = vmatprep.subr.mxu0 0.0
        %1590 = vmatpush2.msra.mxu0 %v1402
        %1591 = vmatprep.mubr.f32.mxu0 %v1384
        %1592 = vmatmul.mubr.f32.gmra.mxu0 %v1382
        %v1593 = vpop.f32.mrf.mxu0
        %v1594 = vadd.f32 %v1524, %v1593
        %v1595 = vpop.f32.mrf.mxu0
        %1596 = vdwg.mxu0
        %s1597 = scalar_lea.vmem %s266, 512
        %v1598 = vld [vmem:[%s1597] sm:$0xff]
        %v1599 = vld [vmem:[%s1597 + $0x8] sm:$0xff]
        %v1600 = vld [vmem:[%s1597 + $0x10] sm:$0xff]
        %v1601 = vld [vmem:[%s1597 + $0x18] sm:$0xff]
        %v1602 = vld [vmem:[%s1597 + $0x20] sm:$0xff]
        %v1603 = vld [vmem:[%s1597 + $0x28] sm:$0xff]
        %v1604 = vld [vmem:[%s1597 + $0x30] sm:$0xff]
        %v1605 = vld [vmem:[%s1597 + $0x38] sm:$0xff]
        %v1606 = vld [vmem:[%s1597 + $0x40] sm:$0xff]
        %v1607 = vld [vmem:[%s1597 + $0x48] sm:$0xff]
        %v1608 = vld [vmem:[%s1597 + $0x50] sm:$0xff]
        %v1609 = vld [vmem:[%s1597 + $0x58] sm:$0xff]
        %v1610 = vld [vmem:[%s1597 + $0x60] sm:$0xff]
        %v1611 = vld [vmem:[%s1597 + $0x68] sm:$0xff]
        %v1612 = vld [vmem:[%s1597 + $0x70] sm:$0xff]
        %v1613 = vld [vmem:[%s1597 + $0x78] sm:$0xff]
        %v1614 = vld [vmem:[%s1597 + $0x80] sm:$0xff]
        %v1615 = vld [vmem:[%s1597 + $0x88] sm:$0xff]
        %v1616 = vld [vmem:[%s1597 + $0x90] sm:$0xff]
        %v1617 = vld [vmem:[%s1597 + $0x98] sm:$0xff]
        %v1618 = vld [vmem:[%s1597 + $0xa0] sm:$0xff]
        %v1619 = vld [vmem:[%s1597 + $0xa8] sm:$0xff]
        %v1620 = vld [vmem:[%s1597 + $0xb0] sm:$0xff]
        %v1621 = vld [vmem:[%s1597 + $0xb8] sm:$0xff]
        %v1622 = vld [vmem:[%s1597 + $0xc0] sm:$0xff]
        %v1623 = vld [vmem:[%s1597 + $0xc8] sm:$0xff]
        %v1624 = vld [vmem:[%s1597 + $0xd0] sm:$0xff]
        %v1625 = vld [vmem:[%s1597 + $0xd8] sm:$0xff]
        %v1626 = vld [vmem:[%s1597 + $0xe0] sm:$0xff]
        %v1627 = vld [vmem:[%s1597 + $0xe8] sm:$0xff]
        %v1628 = vld [vmem:[%s1597 + $0xf0] sm:$0xff]
        %v1629 = vld [vmem:[%s1597 + $0xf8] sm:$0xff]
        %v1630 = vrot.slane %v1382, 2
        %v1631 = vrot.slane %v1384, 2
        %1634 = vmatprep.subr.mxu0 0.0
        %1635 = vmatpush1.msra.mxu0 %v1613
        %1636 = vmatprep.subr.mxu0 0.0
        %1637 = vmatpush1.msra.mxu0 %v1612
        %1638 = vmatprep.subr.mxu0 0.0
        %1639 = vmatpush1.msra.mxu0 %v1611
        %1640 = vmatprep.subr.mxu0 0.0
        %1641 = vmatpush1.msra.mxu0 %v1610
        %1642 = vmatprep.subr.mxu0 0.0
        %1643 = vmatpush1.msra.mxu0 %v1609
        %1644 = vmatprep.subr.mxu0 0.0
        %1645 = vmatpush1.msra.mxu0 %v1608
        %1646 = vmatprep.subr.mxu0 0.0
        %1647 = vmatpush1.msra.mxu0 %v1607
        %1648 = vmatprep.subr.mxu0 0.0
        %1649 = vmatpush1.msra.mxu0 %v1606
        %1650 = vmatprep.subr.mxu0 0.0
        %1651 = vmatpush1.msra.mxu0 %v1605
        %1652 = vmatprep.subr.mxu0 0.0
        %1653 = vmatpush1.msra.mxu0 %v1604
        %1654 = vmatprep.subr.mxu0 0.0
        %1655 = vmatpush1.msra.mxu0 %v1603
        %1656 = vmatprep.subr.mxu0 0.0
        %1657 = vmatpush1.msra.mxu0 %v1602
        %1658 = vmatprep.subr.mxu0 0.0
        %1659 = vmatpush1.msra.mxu0 %v1601
        %1660 = vmatprep.subr.mxu0 0.0
        %1661 = vmatpush1.msra.mxu0 %v1600
        %1662 = vmatprep.subr.mxu0 0.0
        %1663 = vmatpush1.msra.mxu0 %v1599
        %1664 = vmatprep.subr.mxu0 0.0
        %1665 = vmatpush1.msra.mxu0 %v1598
        %1666 = vmatprep.subr.mxu0 0.0
        %1667 = vmatpush2.msra.mxu0 %v1629
        %1668 = vmatprep.subr.mxu0 0.0
        %1669 = vmatpush2.msra.mxu0 %v1628
        %1670 = vmatprep.subr.mxu0 0.0
        %1671 = vmatpush2.msra.mxu0 %v1627
        %1672 = vmatprep.subr.mxu0 0.0
        %1673 = vmatpush2.msra.mxu0 %v1626
        %1674 = vmatprep.subr.mxu0 0.0
        %1675 = vmatpush2.msra.mxu0 %v1625
        %1676 = vmatprep.subr.mxu0 0.0
        %1677 = vmatpush2.msra.mxu0 %v1624
        %1678 = vmatprep.subr.mxu0 0.0
        %1679 = vmatpush2.msra.mxu0 %v1623
        %1680 = vmatprep.subr.mxu0 0.0
        %1681 = vmatpush2.msra.mxu0 %v1622
        %1682 = vmatprep.subr.mxu0 0.0
        %1683 = vmatpush2.msra.mxu0 %v1621
        %1684 = vmatprep.subr.mxu0 0.0
        %1685 = vmatpush2.msra.mxu0 %v1620
        %1686 = vmatprep.subr.mxu0 0.0
        %1687 = vmatpush2.msra.mxu0 %v1619
        %1688 = vmatprep.subr.mxu0 0.0
        %1689 = vmatpush2.msra.mxu0 %v1618
        %1690 = vmatprep.subr.mxu0 0.0
        %1691 = vmatpush2.msra.mxu0 %v1617
        %1692 = vmatprep.subr.mxu0 0.0
        %1693 = vmatpush2.msra.mxu0 %v1616
        %1694 = vmatprep.subr.mxu0 0.0
        %1695 = vmatpush2.msra.mxu0 %v1615
        %1696 = vmatprep.subr.mxu0 0.0
        %1697 = vmatpush2.msra.mxu0 %v1614
        %1698 = vmatprep.mubr.f32.mxu0 %v1631
        %1699 = vmatmul.mubr.f32.gmra.mxu0 %v1630
        %v1700 = vpop.f32.mrf.mxu0
        %v1701 = vadd.f32 0.0, %v1700
        %v1702 = vpop.f32.mrf.mxu0
        %1703 = vdwg.mxu0
        %v1704 = vadd.f32 %v1594, %v1701
        %v1705 = vld [vmem:[%s260] sm:$0x1]
        %v1706 = vadd.f32 %v1705, %v1704
        %vm1707 = vcmask 122880
        %1708 = vst.msk [vmem:[%s260] sm:$0x1] %vm1707, %v1706
        // Predicated region
        $region49: #{tpu_custom_call.1} parent=35 // pred_check
          %p1709 = pneg %p268
        $region50: #{tpu_custom_call.1} parent=35 // pred_check_branch
          %1711 = sbr.rel (%p1709) target = $region52
        $region51: #{tpu_custom_call.1} parent=35 // pred_region
          %v1712 = vld [vmem:[%s260] sm:$0x1]
          %s1713 = sld [smem:[#allocation2]]
          %v1714 = vstv %s1713
          %v1715 = vadd.f32 %v1712, %v1714
          %1716 = vst.msk [vmem:[%s260] sm:$0x1] %vm1707, %v1715
        $region52: #{tpu_custom_call.1} parent=35 // pred_fallthru
          _
        %s1717 = sand.u32 %s139, 1
        %s1718 = scalar_lea.sflag [#allocation5], %s1717
        %s1719 = sand.u32 %s139, 1
        %s1720 = scalar_lea.vmem [#allocation8], %s1719
        // Predicated region
        $region53: #{tpu_custom_call.1} parent=35 // pred_check
          %p1721 = pneg %p149
        $region54: #{tpu_custom_call.1} parent=35 // pred_check_branch
          %1723 = sbr.rel (%p1721) target = $region56
        $region55: #{tpu_custom_call.1} parent=35 // pred_region
          %s1725 = ssub.s32 16, 16
          %1726 = vsyncadd %s1718, %s1725
          %s1727 = smul.addr %s27, 16
          %s1728 = scalar_lea.hbm %s4, %s1727
          %s1730 = sshll.u32 %s1720, 4
          %s1731 = int_to_ptr.vmem [resolvable:$true] %s1730
          %1733 = dma.vmem_to_hbm [thread:$0]  %s1731, 16, %s1728, %s1718
        $region56: #{tpu_custom_call.1} parent=35 // pred_fallthru
          _
      $region36: #{tpu_custom_call.1} parent=5 // pred_fallthru
        _
      %p1734 = scmp.le.s32.totalorder 2, %s18
      // Predicated region
      $region57: #{tpu_custom_call.1} parent=5 // pred_check
        %p1735 = pneg %p1734
      $region58: #{tpu_custom_call.1} parent=5 // pred_check_branch
        %1737 = sbr.rel (%p1735) target = $region60
      $region59: #{tpu_custom_call.1} parent=5 // pred_region
        %s1738 = ssub.s32 %s18, 2
        // Predicated region
        $region61: #{tpu_custom_call.1} parent=59 // pred_check
          %p1739 = pneg %p155
        $region62: #{tpu_custom_call.1} parent=59 // pred_check_branch
          %1741 = sbr.rel (%p1739) target = $region64
        $region63: #{tpu_custom_call.1} parent=59 // pred_region
          %s1742 = sand.u32 %s140, 1
          %s1743 = scalar_lea.sflag [#allocation5], %s1742
          %s1744 = sand.u32 %s140, 1
          %s1745 = scalar_lea.vmem [#allocation8], %s1744
          %1746 = dma.done %s1743, 16
        $region64: #{tpu_custom_call.1} parent=59 // pred_fallthru
          _
      $region60: #{tpu_custom_call.1} parent=5 // pred_fallthru
        _
    $region6: #{tpu_custom_call.1} parent=1 // loop_footer
      %s22 = sadd.s32 1, %s18
    $region7: #{tpu_custom_call.1} parent=1 // loop_footer_branch
      %17 = sbr.rel target = $region3
    $region8: #{tpu_custom_call.1} parent=1 // loop_exit
      _
    %1747 = vsyncpa [#allocation4], 1
    %s1748 = scalar_lea.sflag [#allocation4], 1
    %1749 = vsyncpa %s1748, 1
    %1750 = vsyncpa [#allocation7], 1
    %1751 = vsyncpa [#allocation5], 1
    %s1752 = scalar_lea.sflag [#allocation5], 1
    %1753 = vsyncpa %s1752, 1

</llo_original>
